<compile_context>
chip_gen: v6e
topology: v6e:2x2x1
jax: 0.10.0
libtpu: 0.0.40
codegen_flags: <defaults>
</compile_context>

<pallas_src>
import functools

import jax
import jax.numpy as jnp
from jax import lax
from jax.experimental import pallas as pl
from jax.experimental.pallas import tpu as pltpu


def _disc_block_kernel(x_ref, w1_ref, b1_ref, w2_ref, b2_ref, mask_ref,
                       out_ref, rhs_ref, ypl_ref, *, H, W, bblk):
    # Layout (per batch element):
    #   x_ref:   (bblk, Cin, 4*PITCH)  4 zero-padded parity planes of the input,
    #            plane (r,c) holds padded pixel (2u+r, 2v+c), flat pitch Wh.
    #   rhs_ref: (9*Cin, bblk*4*NP2)   stacked-K im2col scratch (both convs).
    #   ypl_ref: (Cin, bblk*4*PITCH)   zero-padded parity planes of conv1's output.
    #   out_ref: (bblk, Cout, NP2)     pooled output, 1 junk col per row (wrapper strips).
    H2, W2 = H // 2, W // 2
    Hh, Wh = H2 + 1, W2 + 1            # parity-plane dims: ((H+2)/2, (W+2)/2)
    NP2 = H2 * Wh                      # cols per (element, output phase), incl. 1 junk col/row
    PITCH = Hh * Wh + 1                # flat pitch of every plane (1 slack lane)
    Cin = w1_ref.shape[0]
    Cout = w2_ref.shape[0]
    cdt = rhs_ref.dtype
    npc = 4 * NP2                      # columns per element

    # ---- hoisted grid-step invariants (loaded once; no per-element rebroadcast) ----
    w1s = w1_ref[...]                  # (Cin, 9*Cin)
    w2s = w2_ref[...]                  # (Cout, 9*Cin)
    bias1 = b1_ref[...]                # (Cin, 1)  f32
    bias2 = b2_ref[...]                # (Cout, 1) f32
    mask = mask_ref[...]               # (1, bblk*4*NP2) f32, 0.0 on junk columns
    zstrip = jnp.zeros((Cin, Wh + 1), cdt)

    def tap_geom(pa, pb, t):
        # output phase (pa, pb), tap t=(ky,kx)  ->  source plane index + flat offset
        ky, kx = divmod(t, 3)
        ry, qy = (pa + ky) % 2, (pa + ky) // 2
        rx, qx = (pb + kx) % 2, (pb + kx) // 2
        return ry * 2 + rx, qy * Wh + qx

    # ---- conv1: im2col stacked along K (9*Cin)  ->  ONE MXU matmul ----
    for bi in range(bblk):
        for pa in (0, 1):
            for pb in (0, 1):
                col0 = bi * npc + (pa * 2 + pb) * NP2
                for t in range(9):
                    plane, off = tap_geom(pa, pb, t)
                    src = plane * PITCH + off
                    rhs_ref[t * Cin:(t + 1) * Cin, col0:col0 + NP2] = (
                        x_ref[bi, :, src:src + NP2])
    acc1 = jnp.dot(w1s, rhs_ref[...], preferred_element_type=jnp.float32) + bias1
    y = jnp.where(acc1 > 0, acc1, 0.2 * acc1)          # LeakyReLU(0.2)
    y = (y * mask).astype(cdt)                         # junk cols -> 0 == conv2 zero padding

    # ---- scatter y phases into zero-padded conv2-input parity planes ----
    # plane (r,c) of padded-y  <-  y phase (1-r, 1-c) stored at offset (1-r)*Wh + (1-c),
    # with small zero strips for the remaining border; only borders are zero-filled.
    for bi in range(bblk):
        for r in (0, 1):
            for c in (0, 1):
                base = (bi * 4 + r * 2 + c) * PITCH
                doff = (1 - r) * Wh + (1 - c)
                sp = (1 - r) * 2 + (1 - c)
                s0 = bi * npc + sp * NP2
                if doff > 0:
                    ypl_ref[:, base:base + doff] = zstrip[:, :doff]
                ypl_ref[:, base + doff:base + doff + NP2] = y[:, s0:s0 + NP2]
                tail = PITCH - doff - NP2
                if tail > 0:
                    ypl_ref[:, base + doff + NP2:base + PITCH] = zstrip[:, :tail]

    # ---- conv2: same stacked-K structure reading the y parity planes ----
    for bi in range(bblk):
        for pa in (0, 1):
            for pb in (0, 1):
                col0 = bi * npc + (pa * 2 + pb) * NP2
                for t in range(9):
                    plane, off = tap_geom(pa, pb, t)
                    src = (bi * 4 + plane) * PITCH + off
                    rhs_ref[t * Cin:(t + 1) * Cin, col0:col0 + NP2] = (
                        ypl_ref[:, src:src + NP2])
    acc2 = jnp.dot(w2s, rhs_ref[...], preferred_element_type=jnp.float32) + bias2
    z = jnp.where(acc2 > 0, acc2, 0.2 * acc2)          # (Cout, bblk*4*NP2)

    # ---- 2x2 avg pool == mean of the 4 contiguous phase blocks ----
    for bi in range(bblk):
        b0 = bi * npc
        p = (z[:, b0:b0 + NP2] + z[:, b0 + NP2:b0 + 2 * NP2]
             + z[:, b0 + 2 * NP2:b0 + 3 * NP2] + z[:, b0 + 3 * NP2:b0 + 4 * NP2])
        out_ref[bi] = (0.25 * p).astype(out_ref.dtype)


@functools.partial(jax.jit, static_argnames=("block_b", "storage_dtype"))
def discriminator_block(x_nchw, w1, b1, w2, b2, *, block_b=None,
                        storage_dtype=jnp.bfloat16):
    """x: (B, Cin, H, W); w*: OIHW 3x3 conv weights; returns (B, Cout, H/2, W/2)."""
    B, Cin, H, W = x_nchw.shape
    Cout = w2.shape[0]
    assert H % 2 == 0 and W % 2 == 0
    assert w1.shape == (Cin, Cin, 3, 3) and w2.shape == (Cout, Cin, 3, 3)
    H2, W2 = H // 2, W // 2
    Hh, Wh = H2 + 1, W2 + 1
    NP2 = H2 * Wh
    PITCH = Hh * Wh + 1

    # Fattest batch blocks that keep >= 2 grid steps (both v7x TCs busy; fewer,
    # larger steps amortize the ~0.35us/step overhead on single-TC v5e/v6e).
    if block_b is None:
        block_b = B // 2 if (B >= 4 and B % 2 == 0) else 1
    assert B % block_b == 0
    grid = (B // block_b,)
    NT = block_b * 4 * NP2
    cdt = storage_dtype

    # ---- wrapper glue: one fused cast + pad + space-to-depth layout pass ----
    xpad = jnp.pad(x_nchw.astype(cdt), ((0, 0), (0, 0), (1, 1), (1, 1)))
    xph = xpad.reshape(B, Cin, Hh, 2, Wh, 2).transpose(0, 1, 3, 5, 2, 4)
    xph = xph.reshape(B, Cin, 4, Hh * Wh)
    xph = jnp.pad(xph, ((0, 0), (0, 0), (0, 0), (0, PITCH - Hh * Wh)))
    xplanes = xph.reshape(B, Cin, 4 * PITCH)

    # stacked-K weights: (O, ky, kx, I) -> (O, 9*Cin); f32 biases; junk-col mask
    w1s = jnp.transpose(w1.astype(cdt), (0, 2, 3, 1)).reshape(Cin, 9 * Cin)
    w2s = jnp.transpose(w2.astype(cdt), (0, 2, 3, 1)).reshape(Cout, 9 * Cin)
    b1c = b1.astype(jnp.float32).reshape(Cin, 1)
    b2c = b2.astype(jnp.float32).reshape(Cout, 1)
    colpat = ((jnp.arange(NP2, dtype=jnp.int32) % Wh) < W2).astype(jnp.float32)
    mask = jnp.tile(colpat, block_b * 4).reshape(1, NT)

    kernel = functools.partial(_disc_block_kernel, H=H, W=W, bblk=block_b)

    out = pl.pallas_call(
        kernel,
        out_shape=jax.ShapeDtypeStruct((B, Cout, NP2), jnp.float32),
        grid_spec=pltpu.PrefetchScalarGridSpec(
            num_scalar_prefetch=0,
            grid=grid,
            in_specs=[
                pl.BlockSpec((block_b, Cin, 4 * PITCH), lambda i: (i, 0, 0)),
                # grid-invariant operands (constant index_map => fetched once;
                # could add pipeline_mode=pl.Buffered(1) once Cin/Cout are large)
                pl.BlockSpec((Cin, 9 * Cin), lambda i: (0, 0)),
                pl.BlockSpec((Cin, 1), lambda i: (0, 0)),
                pl.BlockSpec((Cout, 9 * Cin), lambda i: (0, 0)),
                pl.BlockSpec((Cout, 1), lambda i: (0, 0)),
                pl.BlockSpec((1, NT), lambda i: (0, 0)),
            ],
            out_specs=pl.BlockSpec((block_b, Cout, NP2), lambda i: (i, 0, 0)),
            scratch_shapes=[
                pltpu.VMEM((9 * Cin, NT), cdt),                   # stacked-K im2col RHS
                pltpu.VMEM((Cin, block_b * 4 * PITCH), cdt),      # padded y parity planes
            ],
        ),
        compiler_params=pltpu.CompilerParams(
            dimension_semantics=("parallel",),
            vmem_limit_bytes=48 * 1024 * 1024),
    )(xplanes, w1s, b1c, w2s, b2c, mask)

    # drop the 1 junk column per pooled row; already NCHW-ordered otherwise
    return out.reshape(B, Cout, H2, Wh)[:, :, :, :W2]


def _ref_forward(x_nchw, w1, b1, w2, b2):
    """Pure-JAX reference mirroring the PyTorch module."""
    dn = ('NCHW', 'OIHW', 'NCHW')
    y = lax.conv_general_dilated(x_nchw, w1, (1, 1), 'SAME', dimension_numbers=dn,
                                 precision=lax.Precision.HIGHEST)
    y = y + b1[None, :, None, None]
    y = jnp.where(y > 0, y, 0.2 * y)
    y = lax.conv_general_dilated(y, w2, (1, 1), 'SAME', dimension_numbers=dn,
                                 precision=lax.Precision.HIGHEST)
    y = y + b2[None, :, None, None]
    y = jnp.where(y > 0, y, 0.2 * y)
    B, C, H, W = y.shape
    return y.reshape(B, C, H // 2, 2, W // 2, 2).mean(axis=(3, 5))


def _run_check(B, Cin, Cout, H, W, *, seed=0, storage_dtype=jnp.float32,
               atol=5e-3, rtol=5e-3):
    key = jax.random.PRNGKey(seed)
    kx_, k1, kb1, k2, kb2 = jax.random.split(key, 5)
    x = jax.random.normal(kx_, (B, Cin, H, W), jnp.float32)
    bound = 1.0 / ((Cin * 9) ** 0.5)   # PyTorch-default-style uniform init
    w1 = jax.random.uniform(k1, (Cin, Cin, 3, 3), jnp.float32, -bound, bound)
    b1 = jax.random.uniform(kb1, (Cin,), jnp.float32, -bound, bound)
    w2 = jax.random.uniform(k2, (Cout, Cin, 3, 3), jnp.float32, -bound, bound)
    b2 = jax.random.uniform(kb2, (Cout,), jnp.float32, -bound, bound)

    out = jax.block_until_ready(
        discriminator_block(x, w1, b1, w2, b2, storage_dtype=storage_dtype))
    ref = _ref_forward(x, w1, b1, w2, b2)
    assert out.shape == (B, Cout, H // 2, W // 2), out.shape
    err = float(jnp.max(jnp.abs(out - ref)))
    assert jnp.allclose(out, ref, atol=atol, rtol=rtol), err


if __name__ == "__main__":
    # exact-parity config: f32 storage, block_b=1 -> 2 parallel grid steps
    _run_check(B=2, Cin=4, Cout=8, H=16, W=16,
               storage_dtype=jnp.float32, atol=5e-3, rtol=5e-3)
    # recommended bf16-storage config (f32 accumulation), batch block of 2
    _run_check(B=4, Cin=8, Cout=16, H=16, W=16, seed=1,
               storage_dtype=jnp.bfloat16, atol=7.5e-2, rtol=7.5e-2)
    print("KERNEL_OK")
</pallas_src>

<mosaic_0001>
module attributes {stable_mosaic.version = 11 : i64} {
  func.func @_disc_block_kernel(%arg0: i32, %arg1: memref<1x4x328xf32, #tpu.memory_space<vmem>>, %arg2: memref<4x36xf32, #tpu.memory_space<vmem>>, %arg3: memref<4x1xf32, #tpu.memory_space<vmem>>, %arg4: memref<8x36xf32, #tpu.memory_space<vmem>>, %arg5: memref<8x1xf32, #tpu.memory_space<vmem>>, %arg6: memref<1x288xf32, #tpu.memory_space<vmem>>, %arg7: memref<1x8x72xf32, #tpu.memory_space<vmem>>, %arg8: memref<36x288xf32, #tpu.memory_space<vmem>>, %arg9: memref<4x328xf32, #tpu.memory_space<vmem>>) attributes {dimension_semantics = [#tpu.dimension_semantics<parallel>], iteration_bounds = array<i64: 2>, scalar_prefetch = 0 : i64, scratch_operands = 2 : i64, tpu.core_type = #tpu.core_type<tc>, window_params = [{transform_indices = @transform_0, window_bounds = array<i64: 1, 4, 328>}, {pipeline_mode = #tpu.pipeline_mode<synchronous>, transform_indices = @transform_1, window_bounds = array<i64: 4, 36>}, {pipeline_mode = #tpu.pipeline_mode<synchronous>, transform_indices = @transform_2, window_bounds = array<i64: 4, 1>}, {pipeline_mode = #tpu.pipeline_mode<synchronous>, transform_indices = @transform_3, window_bounds = array<i64: 8, 36>}, {pipeline_mode = #tpu.pipeline_mode<synchronous>, transform_indices = @transform_4, window_bounds = array<i64: 8, 1>}, {pipeline_mode = #tpu.pipeline_mode<synchronous>, transform_indices = @transform_5, window_bounds = array<i64: 1, 288>}, {transform_indices = @transform_6, window_bounds = array<i64: 1, 8, 72>}]} {
    %c0 = arith.constant 0 : index
    %c0_0 = arith.constant 0 : index
    %0 = vector.load %arg2[%c0, %c0_0] : memref<4x36xf32, #tpu.memory_space<vmem>>, vector<4x36xf32>
    %c0_1 = arith.constant 0 : index
    %c0_2 = arith.constant 0 : index
    %1 = vector.load %arg4[%c0_1, %c0_2] : memref<8x36xf32, #tpu.memory_space<vmem>>, vector<8x36xf32>
    %c0_3 = arith.constant 0 : index
    %c0_4 = arith.constant 0 : index
    %2 = vector.load %arg3[%c0_3, %c0_4] : memref<4x1xf32, #tpu.memory_space<vmem>>, vector<4x1xf32>
    %c0_5 = arith.constant 0 : index
    %c0_6 = arith.constant 0 : index
    %3 = vector.load %arg5[%c0_5, %c0_6] : memref<8x1xf32, #tpu.memory_space<vmem>>, vector<8x1xf32>
    %c0_7 = arith.constant 0 : index
    %c0_8 = arith.constant 0 : index
    %4 = vector.load %arg6[%c0_7, %c0_8] : memref<1x288xf32, #tpu.memory_space<vmem>>, vector<1x288xf32>
    %cst = arith.constant 0.000000e+00 : f32
    %5 = vector.broadcast %cst : f32 to vector<4x10xf32>
    %c0_9 = arith.constant 0 : index
    %c0_10 = arith.constant 0 : index
    %c0_11 = arith.constant 0 : index
    %6 = vector.load %arg1[%c0_9, %c0_10, %c0_11] : memref<1x4x328xf32, #tpu.memory_space<vmem>>, vector<1x4x72xf32>
    %7 = vector.shape_cast %6 : vector<1x4x72xf32> to vector<4x72xf32>
    %c0_12 = arith.constant 0 : index
    %c0_13 = arith.constant 0 : index
    %8 = vector.load %arg8[%c0_12, %c0_13] : memref<36x288xf32, #tpu.memory_space<vmem>>, vector<4x72xf32>
    tpu.vector_store %arg8[%c0_12, %c0_13], %7 {strides = array<i32>} : memref<36x288xf32, #tpu.memory_space<vmem>>, vector<4x72xf32>,
    %c0_14 = arith.constant 0 : index
    %c0_15 = arith.constant 0 : index
    %c82 = arith.constant 82 : index
    %9 = vector.load %arg1[%c0_14, %c0_15, %c82] : memref<1x4x328xf32, #tpu.memory_space<vmem>>, vector<1x4x72xf32>
    %10 = vector.shape_cast %9 : vector<1x4x72xf32> to vector<4x72xf32>
    %c4 = arith.constant 4 : index
    %c0_16 = arith.constant 0 : index
    %11 = vector.load %arg8[%c4, %c0_16] : memref<36x288xf32, #tpu.memory_space<vmem>>, vector<4x72xf32>
    tpu.vector_store %arg8[%c4, %c0_16], %10 {strides = array<i32>} : memref<36x288xf32, #tpu.memory_space<vmem>>, vector<4x72xf32>,
    %c0_17 = arith.constant 0 : index
    %c0_18 = arith.constant 0 : index
    %c1 = arith.constant 1 : index
    %12 = vector.load %arg1[%c0_17, %c0_18, %c1] : memref<1x4x328xf32, #tpu.memory_space<vmem>>, vector<1x4x72xf32>
    %13 = vector.shape_cast %12 : vector<1x4x72xf32> to vector<4x72xf32>
    %c8 = arith.constant 8 : index
    %c0_19 = arith.constant 0 : index
    %14 = vector.load %arg8[%c8, %c0_19] : memref<36x288xf32, #tpu.memory_space<vmem>>, vector<4x72xf32>
    tpu.vector_store %arg8[%c8, %c0_19], %13 {strides = array<i32>} : memref<36x288xf32, #tpu.memory_space<vmem>>, vector<4x72xf32>,
    %c0_20 = arith.constant 0 : index
    %c0_21 = arith.constant 0 : index
    %c164 = arith.constant 164 : index
    %15 = vector.load %arg1[%c0_20, %c0_21, %c164] : memref<1x4x328xf32, #tpu.memory_space<vmem>>, vector<1x4x72xf32>
    %16 = vector.shape_cast %15 : vector<1x4x72xf32> to vector<4x72xf32>
    %c12 = arith.constant 12 : index
    %c0_22 = arith.constant 0 : index
    %17 = vector.load %arg8[%c12, %c0_22] : memref<36x288xf32, #tpu.memory_space<vmem>>, vector<4x72xf32>
    tpu.vector_store %arg8[%c12, %c0_22], %16 {strides = array<i32>} : memref<36x288xf32, #tpu.memory_space<vmem>>, vector<4x72xf32>,
    %c0_23 = arith.constant 0 : index
    %c0_24 = arith.constant 0 : index
    %c246 = arith.constant 246 : index
    %18 = vector.load %arg1[%c0_23, %c0_24, %c246] : memref<1x4x328xf32, #tpu.memory_space<vmem>>, vector<1x4x72xf32>
    %19 = vector.shape_cast %18 : vector<1x4x72xf32> to vector<4x72xf32>
    %c16 = arith.constant 16 : index
    %c0_25 = arith.constant 0 : index
    %20 = vector.load %arg8[%c16, %c0_25] : memref<36x288xf32, #tpu.memory_space<vmem>>, vector<4x72xf32>
    tpu.vector_store %arg8[%c16, %c0_25], %19 {strides = array<i32>} : memref<36x288xf32, #tpu.memory_space<vmem>>, vector<4x72xf32>,
    %c0_26 = arith.constant 0 : index
    %c0_27 = arith.constant 0 : index
    %c165 = arith.constant 165 : index
    %21 = vector.load %arg1[%c0_26, %c0_27, %c165] : memref<1x4x328xf32, #tpu.memory_space<vmem>>, vector<1x4x72xf32>
    %22 = vector.shape_cast %21 : vector<1x4x72xf32> to vector<4x72xf32>
    %c20 = arith.constant 20 : index
    %c0_28 = arith.constant 0 : index
    %23 = vector.load %arg8[%c20, %c0_28] : memref<36x288xf32, #tpu.memory_space<vmem>>, vector<4x72xf32>
    tpu.vector_store %arg8[%c20, %c0_28], %22 {strides = array<i32>} : memref<36x288xf32, #tpu.memory_space<vmem>>, vector<4x72xf32>,
    %c0_29 = arith.constant 0 : index
    %c0_30 = arith.constant 0 : index
    %c9 = arith.constant 9 : index
    %24 = vector.load %arg1[%c0_29, %c0_30, %c9] : memref<1x4x328xf32, #tpu.memory_space<vmem>>, vector<1x4x72xf32>
    %25 = vector.shape_cast %24 : vector<1x4x72xf32> to vector<4x72xf32>
    %c24 = arith.constant 24 : index
    %c0_31 = arith.constant 0 : index
    %26 = vector.load %arg8[%c24, %c0_31] : memref<36x288xf32, #tpu.memory_space<vmem>>, vector<4x72xf32>
    tpu.vector_store %arg8[%c24, %c0_31], %25 {strides = array<i32>} : memref<36x288xf32, #tpu.memory_space<vmem>>, vector<4x72xf32>,
    %c0_32 = arith.constant 0 : index
    %c0_33 = arith.constant 0 : index
    %c91 = arith.constant 91 : index
    %27 = vector.load %arg1[%c0_32, %c0_33, %c91] : memref<1x4x328xf32, #tpu.memory_space<vmem>>, vector<1x4x72xf32>
    %28 = vector.shape_cast %27 : vector<1x4x72xf32> to vector<4x72xf32>
    %c28 = arith.constant 28 : index
    %c0_34 = arith.constant 0 : index
    %29 = vector.load %arg8[%c28, %c0_34] : memref<36x288xf32, #tpu.memory_space<vmem>>, vector<4x72xf32>
    tpu.vector_store %arg8[%c28, %c0_34], %28 {strides = array<i32>} : memref<36x288xf32, #tpu.memory_space<vmem>>, vector<4x72xf32>,
    %c0_35 = arith.constant 0 : index
    %c0_36 = arith.constant 0 : index
    %c10 = arith.constant 10 : index
    %30 = vector.load %arg1[%c0_35, %c0_36, %c10] : memref<1x4x328xf32, #tpu.memory_space<vmem>>, vector<1x4x72xf32>
    %31 = vector.shape_cast %30 : vector<1x4x72xf32> to vector<4x72xf32>
    %c32 = arith.constant 32 : index
    %c0_37 = arith.constant 0 : index
    %32 = vector.load %arg8[%c32, %c0_37] : memref<36x288xf32, #tpu.memory_space<vmem>>, vector<4x72xf32>
    tpu.vector_store %arg8[%c32, %c0_37], %31 {strides = array<i32>} : memref<36x288xf32, #tpu.memory_space<vmem>>, vector<4x72xf32>,
    %c0_38 = arith.constant 0 : index
    %c0_39 = arith.constant 0 : index
    %c82_40 = arith.constant 82 : index
    %33 = vector.load %arg1[%c0_38, %c0_39, %c82_40] : memref<1x4x328xf32, #tpu.memory_space<vmem>>, vector<1x4x72xf32>
    %34 = vector.shape_cast %33 : vector<1x4x72xf32> to vector<4x72xf32>
    %c0_41 = arith.constant 0 : index
    %c72 = arith.constant 72 : index
    %35 = vector.load %arg8[%c0_41, %c72] : memref<36x288xf32, #tpu.memory_space<vmem>>, vector<4x72xf32>
    tpu.vector_store %arg8[%c0_41, %c72], %34 {strides = array<i32>} : memref<36x288xf32, #tpu.memory_space<vmem>>, vector<4x72xf32>,
    %c0_42 = arith.constant 0 : index
    %c0_43 = arith.constant 0 : index
    %c1_44 = arith.constant 1 : index
    %36 = vector.load %arg1[%c0_42, %c0_43, %c1_44] : memref<1x4x328xf32, #tpu.memory_space<vmem>>, vector<1x4x72xf32>
    %37 = vector.shape_cast %36 : vector<1x4x72xf32> to vector<4x72xf32>
    %c4_45 = arith.constant 4 : index
    %c72_46 = arith.constant 72 : index
    %38 = vector.load %arg8[%c4_45, %c72_46] : memref<36x288xf32, #tpu.memory_space<vmem>>, vector<4x72xf32>
    tpu.vector_store %arg8[%c4_45, %c72_46], %37 {strides = array<i32>} : memref<36x288xf32, #tpu.memory_space<vmem>>, vector<4x72xf32>,
    %c0_47 = arith.constant 0 : index
    %c0_48 = arith.constant 0 : index
    %c83 = arith.constant 83 : index
    %39 = vector.load %arg1[%c0_47, %c0_48, %c83] : memref<1x4x328xf32, #tpu.memory_space<vmem>>, vector<1x4x72xf32>
    %40 = vector.shape_cast %39 : vector<1x4x72xf32> to vector<4x72xf32>
    %c8_49 = arith.constant 8 : index
    %c72_50 = arith.constant 72 : index
    %41 = vector.load %arg8[%c8_49, %c72_50] : memref<36x288xf32, #tpu.memory_space<vmem>>, vector<4x72xf32>
    tpu.vector_store %arg8[%c8_49, %c72_50], %40 {strides = array<i32>} : memref<36x288xf32, #tpu.memory_space<vmem>>, vector<4x72xf32>,
    %c0_51 = arith.constant 0 : index
    %c0_52 = arith.constant 0 : index
    %c246_53 = arith.constant 246 : index
    %42 = vector.load %arg1[%c0_51, %c0_52, %c246_53] : memref<1x4x328xf32, #tpu.memory_space<vmem>>, vector<1x4x72xf32>
    %43 = vector.shape_cast %42 : vector<1x4x72xf32> to vector<4x72xf32>
    %c12_54 = arith.constant 12 : index
    %c72_55 = arith.constant 72 : index
    %44 = vector.load %arg8[%c12_54, %c72_55] : memref<36x288xf32, #tpu.memory_space<vmem>>, vector<4x72xf32>
    tpu.vector_store %arg8[%c12_54, %c72_55], %43 {strides = array<i32>} : memref<36x288xf32, #tpu.memory_space<vmem>>, vector<4x72xf32>,
    %c0_56 = arith.constant 0 : index
    %c0_57 = arith.constant 0 : index
    %c165_58 = arith.constant 165 : index
    %45 = vector.load %arg1[%c0_56, %c0_57, %c165_58] : memref<1x4x328xf32, #tpu.memory_space<vmem>>, vector<1x4x72xf32>
    %46 = vector.shape_cast %45 : vector<1x4x72xf32> to vector<4x72xf32>
    %c16_59 = arith.constant 16 : index
    %c72_60 = arith.constant 72 : index
    %47 = vector.load %arg8[%c16_59, %c72_60] : memref<36x288xf32, #tpu.memory_space<vmem>>, vector<4x72xf32>
    tpu.vector_store %arg8[%c16_59, %c72_60], %46 {strides = array<i32>} : memref<36x288xf32, #tpu.memory_space<vmem>>, vector<4x72xf32>,
    %c0_61 = arith.constant 0 : index
    %c0_62 = arith.constant 0 : index
    %c247 = arith.constant 247 : index
    %48 = vector.load %arg1[%c0_61, %c0_62, %c247] : memref<1x4x328xf32, #tpu.memory_space<vmem>>, vector<1x4x72xf32>
    %49 = vector.shape_cast %48 : vector<1x4x72xf32> to vector<4x72xf32>
    %c20_63 = arith.constant 20 : index
    %c72_64 = arith.constant 72 : index
    %50 = vector.load %arg8[%c20_63, %c72_64] : memref<36x288xf32, #tpu.memory_space<vmem>>, vector<4x72xf32>
    tpu.vector_store %arg8[%c20_63, %c72_64], %49 {strides = array<i32>} : memref<36x288xf32, #tpu.memory_space<vmem>>, vector<4x72xf32>,
    %c0_65 = arith.constant 0 : index
    %c0_66 = arith.constant 0 : index
    %c91_67 = arith.constant 91 : index
    %51 = vector.load %arg1[%c0_65, %c0_66, %c91_67] : memref<1x4x328xf32, #tpu.memory_space<vmem>>, vector<1x4x72xf32>
    %52 = vector.shape_cast %51 : vector<1x4x72xf32> to vector<4x72xf32>
    %c24_68 = arith.constant 24 : index
    %c72_69 = arith.constant 72 : index
    %53 = vector.load %arg8[%c24_68, %c72_69] : memref<36x288xf32, #tpu.memory_space<vmem>>, vector<4x72xf32>
    tpu.vector_store %arg8[%c24_68, %c72_69], %52 {strides = array<i32>} : memref<36x288xf32, #tpu.memory_space<vmem>>, vector<4x72xf32>,
    %c0_70 = arith.constant 0 : index
    %c0_71 = arith.constant 0 : index
    %c10_72 = arith.constant 10 : index
    %54 = vector.load %arg1[%c0_70, %c0_71, %c10_72] : memref<1x4x328xf32, #tpu.memory_space<vmem>>, vector<1x4x72xf32>
    %55 = vector.shape_cast %54 : vector<1x4x72xf32> to vector<4x72xf32>
    %c28_73 = arith.constant 28 : index
    %c72_74 = arith.constant 72 : index
    %56 = vector.load %arg8[%c28_73, %c72_74] : memref<36x288xf32, #tpu.memory_space<vmem>>, vector<4x72xf32>
    tpu.vector_store %arg8[%c28_73, %c72_74], %55 {strides = array<i32>} : memref<36x288xf32, #tpu.memory_space<vmem>>, vector<4x72xf32>,
    %c0_75 = arith.constant 0 : index
    %c0_76 = arith.constant 0 : index
    %c92 = arith.constant 92 : index
    %57 = vector.load %arg1[%c0_75, %c0_76, %c92] : memref<1x4x328xf32, #tpu.memory_space<vmem>>, vector<1x4x72xf32>
    %58 = vector.shape_cast %57 : vector<1x4x72xf32> to vector<4x72xf32>
    %c32_77 = arith.constant 32 : index
    %c72_78 = arith.constant 72 : index
    %59 = vector.load %arg8[%c32_77, %c72_78] : memref<36x288xf32, #tpu.memory_space<vmem>>, vector<4x72xf32>
    tpu.vector_store %arg8[%c32_77, %c72_78], %58 {strides = array<i32>} : memref<36x288xf32, #tpu.memory_space<vmem>>, vector<4x72xf32>,
    %c0_79 = arith.constant 0 : index
    %c0_80 = arith.constant 0 : index
    %c164_81 = arith.constant 164 : index
    %60 = vector.load %arg1[%c0_79, %c0_80, %c164_81] : memref<1x4x328xf32, #tpu.memory_space<vmem>>, vector<1x4x72xf32>
    %61 = vector.shape_cast %60 : vector<1x4x72xf32> to vector<4x72xf32>
    %c0_82 = arith.constant 0 : index
    %c144 = arith.constant 144 : index
    %62 = vector.load %arg8[%c0_82, %c144] : memref<36x288xf32, #tpu.memory_space<vmem>>, vector<4x72xf32>
    tpu.vector_store %arg8[%c0_82, %c144], %61 {strides = array<i32>} : memref<36x288xf32, #tpu.memory_space<vmem>>, vector<4x72xf32>,
    %c0_83 = arith.constant 0 : index
    %c0_84 = arith.constant 0 : index
    %c246_85 = arith.constant 246 : index
    %63 = vector.load %arg1[%c0_83, %c0_84, %c246_85] : memref<1x4x328xf32, #tpu.memory_space<vmem>>, vector<1x4x72xf32>
    %64 = vector.shape_cast %63 : vector<1x4x72xf32> to vector<4x72xf32>
    %c4_86 = arith.constant 4 : index
    %c144_87 = arith.constant 144 : index
    %65 = vector.load %arg8[%c4_86, %c144_87] : memref<36x288xf32, #tpu.memory_space<vmem>>, vector<4x72xf32>
    tpu.vector_store %arg8[%c4_86, %c144_87], %64 {strides = array<i32>} : memref<36x288xf32, #tpu.memory_space<vmem>>, vector<4x72xf32>,
    %c0_88 = arith.constant 0 : index
    %c0_89 = arith.constant 0 : index
    %c165_90 = arith.constant 165 : index
    %66 = vector.load %arg1[%c0_88, %c0_89, %c165_90] : memref<1x4x328xf32, #tpu.memory_space<vmem>>, vector<1x4x72xf32>
    %67 = vector.shape_cast %66 : vector<1x4x72xf32> to vector<4x72xf32>
    %c8_91 = arith.constant 8 : index
    %c144_92 = arith.constant 144 : index
    %68 = vector.load %arg8[%c8_91, %c144_92] : memref<36x288xf32, #tpu.memory_space<vmem>>, vector<4x72xf32>
    tpu.vector_store %arg8[%c8_91, %c144_92], %67 {strides = array<i32>} : memref<36x288xf32, #tpu.memory_space<vmem>>, vector<4x72xf32>,
    %c0_93 = arith.constant 0 : index
    %c0_94 = arith.constant 0 : index
    %c9_95 = arith.constant 9 : index
    %69 = vector.load %arg1[%c0_93, %c0_94, %c9_95] : memref<1x4x328xf32, #tpu.memory_space<vmem>>, vector<1x4x72xf32>
    %70 = vector.shape_cast %69 : vector<1x4x72xf32> to vector<4x72xf32>
    %c12_96 = arith.constant 12 : index
    %c144_97 = arith.constant 144 : index
    %71 = vector.load %arg8[%c12_96, %c144_97] : memref<36x288xf32, #tpu.memory_space<vmem>>, vector<4x72xf32>
    tpu.vector_store %arg8[%c12_96, %c144_97], %70 {strides = array<i32>} : memref<36x288xf32, #tpu.memory_space<vmem>>, vector<4x72xf32>,
    %c0_98 = arith.constant 0 : index
    %c0_99 = arith.constant 0 : index
    %c91_100 = arith.constant 91 : index
    %72 = vector.load %arg1[%c0_98, %c0_99, %c91_100] : memref<1x4x328xf32, #tpu.memory_space<vmem>>, vector<1x4x72xf32>
    %73 = vector.shape_cast %72 : vector<1x4x72xf32> to vector<4x72xf32>
    %c16_101 = arith.constant 16 : index
    %c144_102 = arith.constant 144 : index
    %74 = vector.load %arg8[%c16_101, %c144_102] : memref<36x288xf32, #tpu.memory_space<vmem>>, vector<4x72xf32>
    tpu.vector_store %arg8[%c16_101, %c144_102], %73 {strides = array<i32>} : memref<36x288xf32, #tpu.memory_space<vmem>>, vector<4x72xf32>,
    %c0_103 = arith.constant 0 : index
    %c0_104 = arith.constant 0 : index
    %c10_105 = arith.constant 10 : index
    %75 = vector.load %arg1[%c0_103, %c0_104, %c10_105] : memref<1x4x328xf32, #tpu.memory_space<vmem>>, vector<1x4x72xf32>
    %76 = vector.shape_cast %75 : vector<1x4x72xf32> to vector<4x72xf32>
    %c20_106 = arith.constant 20 : index
    %c144_107 = arith.constant 144 : index
    %77 = vector.load %arg8[%c20_106, %c144_107] : memref<36x288xf32, #tpu.memory_space<vmem>>, vector<4x72xf32>
    tpu.vector_store %arg8[%c20_106, %c144_107], %76 {strides = array<i32>} : memref<36x288xf32, #tpu.memory_space<vmem>>, vector<4x72xf32>,
    %c0_108 = arith.constant 0 : index
    %c0_109 = arith.constant 0 : index
    %c173 = arith.constant 173 : index
    %78 = vector.load %arg1[%c0_108, %c0_109, %c173] : memref<1x4x328xf32, #tpu.memory_space<vmem>>, vector<1x4x72xf32>
    %79 = vector.shape_cast %78 : vector<1x4x72xf32> to vector<4x72xf32>
    %c24_110 = arith.constant 24 : index
    %c144_111 = arith.constant 144 : index
    %80 = vector.load %arg8[%c24_110, %c144_111] : memref<36x288xf32, #tpu.memory_space<vmem>>, vector<4x72xf32>
    tpu.vector_store %arg8[%c24_110, %c144_111], %79 {strides = array<i32>} : memref<36x288xf32, #tpu.memory_space<vmem>>, vector<4x72xf32>,
    %c0_112 = arith.constant 0 : index
    %c0_113 = arith.constant 0 : index
    %c255 = arith.constant 255 : index
    %81 = vector.load %arg1[%c0_112, %c0_113, %c255] : memref<1x4x328xf32, #tpu.memory_space<vmem>>, vector<1x4x72xf32>
    %82 = vector.shape_cast %81 : vector<1x4x72xf32> to vector<4x72xf32>
    %c28_114 = arith.constant 28 : index
    %c144_115 = arith.constant 144 : index
    %83 = vector.load %arg8[%c28_114, %c144_115] : memref<36x288xf32, #tpu.memory_space<vmem>>, vector<4x72xf32>
    tpu.vector_store %arg8[%c28_114, %c144_115], %82 {strides = array<i32>} : memref<36x288xf32, #tpu.memory_space<vmem>>, vector<4x72xf32>,
    %c0_116 = arith.constant 0 : index
    %c0_117 = arith.constant 0 : index
    %c174 = arith.constant 174 : index
    %84 = vector.load %arg1[%c0_116, %c0_117, %c174] : memref<1x4x328xf32, #tpu.memory_space<vmem>>, vector<1x4x72xf32>
    %85 = vector.shape_cast %84 : vector<1x4x72xf32> to vector<4x72xf32>
    %c32_118 = arith.constant 32 : index
    %c144_119 = arith.constant 144 : index
    %86 = vector.load %arg8[%c32_118, %c144_119] : memref<36x288xf32, #tpu.memory_space<vmem>>, vector<4x72xf32>
    tpu.vector_store %arg8[%c32_118, %c144_119], %85 {strides = array<i32>} : memref<36x288xf32, #tpu.memory_space<vmem>>, vector<4x72xf32>,
    %c0_120 = arith.constant 0 : index
    %c0_121 = arith.constant 0 : index
    %c246_122 = arith.constant 246 : index
    %87 = vector.load %arg1[%c0_120, %c0_121, %c246_122] : memref<1x4x328xf32, #tpu.memory_space<vmem>>, vector<1x4x72xf32>
    %88 = vector.shape_cast %87 : vector<1x4x72xf32> to vector<4x72xf32>
    %c0_123 = arith.constant 0 : index
    %c216 = arith.constant 216 : index
    %89 = vector.load %arg8[%c0_123, %c216] : memref<36x288xf32, #tpu.memory_space<vmem>>, vector<4x72xf32>
    tpu.vector_store %arg8[%c0_123, %c216], %88 {strides = array<i32>} : memref<36x288xf32, #tpu.memory_space<vmem>>, vector<4x72xf32>,
    %c0_124 = arith.constant 0 : index
    %c0_125 = arith.constant 0 : index
    %c165_126 = arith.constant 165 : index
    %90 = vector.load %arg1[%c0_124, %c0_125, %c165_126] : memref<1x4x328xf32, #tpu.memory_space<vmem>>, vector<1x4x72xf32>
    %91 = vector.shape_cast %90 : vector<1x4x72xf32> to vector<4x72xf32>
    %c4_127 = arith.constant 4 : index
    %c216_128 = arith.constant 216 : index
    %92 = vector.load %arg8[%c4_127, %c216_128] : memref<36x288xf32, #tpu.memory_space<vmem>>, vector<4x72xf32>
    tpu.vector_store %arg8[%c4_127, %c216_128], %91 {strides = array<i32>} : memref<36x288xf32, #tpu.memory_space<vmem>>, vector<4x72xf32>,
    %c0_129 = arith.constant 0 : index
    %c0_130 = arith.constant 0 : index
    %c247_131 = arith.constant 247 : index
    %93 = vector.load %arg1[%c0_129, %c0_130, %c247_131] : memref<1x4x328xf32, #tpu.memory_space<vmem>>, vector<1x4x72xf32>
    %94 = vector.shape_cast %93 : vector<1x4x72xf32> to vector<4x72xf32>
    %c8_132 = arith.constant 8 : index
    %c216_133 = arith.constant 216 : index
    %95 = vector.load %arg8[%c8_132, %c216_133] : memref<36x288xf32, #tpu.memory_space<vmem>>, vector<4x72xf32>
    tpu.vector_store %arg8[%c8_132, %c216_133], %94 {strides = array<i32>} : memref<36x288xf32, #tpu.memory_space<vmem>>, vector<4x72xf32>,
    %c0_134 = arith.constant 0 : index
    %c0_135 = arith.constant 0 : index
    %c91_136 = arith.constant 91 : index
    %96 = vector.load %arg1[%c0_134, %c0_135, %c91_136] : memref<1x4x328xf32, #tpu.memory_space<vmem>>, vector<1x4x72xf32>
    %97 = vector.shape_cast %96 : vector<1x4x72xf32> to vector<4x72xf32>
    %c12_137 = arith.constant 12 : index
    %c216_138 = arith.constant 216 : index
    %98 = vector.load %arg8[%c12_137, %c216_138] : memref<36x288xf32, #tpu.memory_space<vmem>>, vector<4x72xf32>
    tpu.vector_store %arg8[%c12_137, %c216_138], %97 {strides = array<i32>} : memref<36x288xf32, #tpu.memory_space<vmem>>, vector<4x72xf32>,
    %c0_139 = arith.constant 0 : index
    %c0_140 = arith.constant 0 : index
    %c10_141 = arith.constant 10 : index
    %99 = vector.load %arg1[%c0_139, %c0_140, %c10_141] : memref<1x4x328xf32, #tpu.memory_space<vmem>>, vector<1x4x72xf32>
    %100 = vector.shape_cast %99 : vector<1x4x72xf32> to vector<4x72xf32>
    %c16_142 = arith.constant 16 : index
    %c216_143 = arith.constant 216 : index
    %101 = vector.load %arg8[%c16_142, %c216_143] : memref<36x288xf32, #tpu.memory_space<vmem>>, vector<4x72xf32>
    tpu.vector_store %arg8[%c16_142, %c216_143], %100 {strides = array<i32>} : memref<36x288xf32, #tpu.memory_space<vmem>>, vector<4x72xf32>,
    %c0_144 = arith.constant 0 : index
    %c0_145 = arith.constant 0 : index
    %c92_146 = arith.constant 92 : index
    %102 = vector.load %arg1[%c0_144, %c0_145, %c92_146] : memref<1x4x328xf32, #tpu.memory_space<vmem>>, vector<1x4x72xf32>
    %103 = vector.shape_cast %102 : vector<1x4x72xf32> to vector<4x72xf32>
    %c20_147 = arith.constant 20 : index
    %c216_148 = arith.constant 216 : index
    %104 = vector.load %arg8[%c20_147, %c216_148] : memref<36x288xf32, #tpu.memory_space<vmem>>, vector<4x72xf32>
    tpu.vector_store %arg8[%c20_147, %c216_148], %103 {strides = array<i32>} : memref<36x288xf32, #tpu.memory_space<vmem>>, vector<4x72xf32>,
    %c0_149 = arith.constant 0 : index
    %c0_150 = arith.constant 0 : index
    %c255_151 = arith.constant 255 : index
    %105 = vector.load %arg1[%c0_149, %c0_150, %c255_151] : memref<1x4x328xf32, #tpu.memory_space<vmem>>, vector<1x4x72xf32>
    %106 = vector.shape_cast %105 : vector<1x4x72xf32> to vector<4x72xf32>
    %c24_152 = arith.constant 24 : index
    %c216_153 = arith.constant 216 : index
    %107 = vector.load %arg8[%c24_152, %c216_153] : memref<36x288xf32, #tpu.memory_space<vmem>>, vector<4x72xf32>
    tpu.vector_store %arg8[%c24_152, %c216_153], %106 {strides = array<i32>} : memref<36x288xf32, #tpu.memory_space<vmem>>, vector<4x72xf32>,
    %c0_154 = arith.constant 0 : index
    %c0_155 = arith.constant 0 : index
    %c174_156 = arith.constant 174 : index
    %108 = vector.load %arg1[%c0_154, %c0_155, %c174_156] : memref<1x4x328xf32, #tpu.memory_space<vmem>>, vector<1x4x72xf32>
    %109 = vector.shape_cast %108 : vector<1x4x72xf32> to vector<4x72xf32>
    %c28_157 = arith.constant 28 : index
    %c216_158 = arith.constant 216 : index
    %110 = vector.load %arg8[%c28_157, %c216_158] : memref<36x288xf32, #tpu.memory_space<vmem>>, vector<4x72xf32>
    tpu.vector_store %arg8[%c28_157, %c216_158], %109 {strides = array<i32>} : memref<36x288xf32, #tpu.memory_space<vmem>>, vector<4x72xf32>,
    %c0_159 = arith.constant 0 : index
    %c0_160 = arith.constant 0 : index
    %c256 = arith.constant 256 : index
    %111 = vector.load %arg1[%c0_159, %c0_160, %c256] : memref<1x4x328xf32, #tpu.memory_space<vmem>>, vector<1x4x72xf32>
    %112 = vector.shape_cast %111 : vector<1x4x72xf32> to vector<4x72xf32>
    %c32_161 = arith.constant 32 : index
    %c216_162 = arith.constant 216 : index
    %113 = vector.load %arg8[%c32_161, %c216_162] : memref<36x288xf32, #tpu.memory_space<vmem>>, vector<4x72xf32>
    tpu.vector_store %arg8[%c32_161, %c216_162], %112 {strides = array<i32>} : memref<36x288xf32, #tpu.memory_space<vmem>>, vector<4x72xf32>,
    %c0_163 = arith.constant 0 : index
    %c0_164 = arith.constant 0 : index
    %114 = vector.load %arg8[%c0_163, %c0_164] : memref<36x288xf32, #tpu.memory_space<vmem>>, vector<36x288xf32>
    %cst_165 = arith.constant dense<0.000000e+00> : vector<4x288xf32>
    %115 = tpu.matmul %0, %114, %cst_165 {dimension_numbers = #tpu.dot_dimension_numbers<[1], [0], [0], [1], [0, 0, 1, 1], [], []>} : vector<4x36xf32>, vector<36x288xf32>, vector<4x288xf32> -> vector<4x288xf32>
    %116 = vector.broadcast %2 : vector<4x1xf32> to vector<4x288xf32>
    %117 = arith.addf %115, %116 : vector<4x288xf32>
    %cst_166 = arith.constant 0.000000e+00 : f32
    %118 = vector.broadcast %cst_166 : f32 to vector<4x288xf32>
    %119 = arith.cmpf ogt, %117, %118 : vector<4x288xf32>
    %cst_167 = arith.constant 2.000000e-01 : f32
    %120 = vector.broadcast %cst_167 : f32 to vector<4x288xf32>
    %121 = arith.mulf %120, %117 : vector<4x288xf32>
    %122 = arith.select %119, %117, %121 : vector<4x288xi1>, vector<4x288xf32>
    %123 = vector.broadcast %4 : vector<1x288xf32> to vector<4x288xf32>
    %124 = arith.mulf %122, %123 : vector<4x288xf32>
    %c0_168 = arith.constant 0 : index
    %c0_169 = arith.constant 0 : index
    %125 = vector.load %arg9[%c0_168, %c0_169] : memref<4x328xf32, #tpu.memory_space<vmem>>, vector<4x10xf32>
    tpu.vector_store %arg9[%c0_168, %c0_169], %5 {strides = array<i32>} : memref<4x328xf32, #tpu.memory_space<vmem>>, vector<4x10xf32>,
    %126 = vector.extract_strided_slice %124 {offsets = [0, 216], sizes = [4, 72], strides = [1, 1]} : vector<4x288xf32> to vector<4x72xf32>
    %c0_170 = arith.constant 0 : index
    %c10_171 = arith.constant 10 : index
    %127 = vector.load %arg9[%c0_170, %c10_171] : memref<4x328xf32, #tpu.memory_space<vmem>>, vector<4x72xf32>
    tpu.vector_store %arg9[%c0_170, %c10_171], %126 {strides = array<i32>} : memref<4x328xf32, #tpu.memory_space<vmem>>, vector<4x72xf32>,
    %128 = vector.extract_strided_slice %5 {offsets = [0, 0], sizes = [4, 9], strides = [1, 1]} : vector<4x10xf32> to vector<4x9xf32>
    %c0_172 = arith.constant 0 : index
    %c82_173 = arith.constant 82 : index
    %129 = vector.load %arg9[%c0_172, %c82_173] : memref<4x328xf32, #tpu.memory_space<vmem>>, vector<4x9xf32>
    tpu.vector_store %arg9[%c0_172, %c82_173], %128 {strides = array<i32>} : memref<4x328xf32, #tpu.memory_space<vmem>>, vector<4x9xf32>,
    %130 = vector.extract_strided_slice %124 {offsets = [0, 144], sizes = [4, 72], strides = [1, 1]} : vector<4x288xf32> to vector<4x72xf32>
    %c0_174 = arith.constant 0 : index
    %c91_175 = arith.constant 91 : index
    %131 = vector.load %arg9[%c0_174, %c91_175] : memref<4x328xf32, #tpu.memory_space<vmem>>, vector<4x72xf32>
    tpu.vector_store %arg9[%c0_174, %c91_175], %130 {strides = array<i32>} : memref<4x328xf32, #tpu.memory_space<vmem>>, vector<4x72xf32>,
    %132 = vector.extract_strided_slice %5 {offsets = [0, 0], sizes = [4, 1], strides = [1, 1]} : vector<4x10xf32> to vector<4x1xf32>
    %c0_176 = arith.constant 0 : index
    %c163 = arith.constant 163 : index
    %133 = vector.load %arg9[%c0_176, %c163] : memref<4x328xf32, #tpu.memory_space<vmem>>, vector<4x1xf32>
    tpu.vector_store %arg9[%c0_176, %c163], %132 {strides = array<i32>} : memref<4x328xf32, #tpu.memory_space<vmem>>, vector<4x1xf32>,
    %134 = vector.extract_strided_slice %5 {offsets = [0, 0], sizes = [4, 1], strides = [1, 1]} : vector<4x10xf32> to vector<4x1xf32>
    %c0_177 = arith.constant 0 : index
    %c164_178 = arith.constant 164 : index
    %135 = vector.load %arg9[%c0_177, %c164_178] : memref<4x328xf32, #tpu.memory_space<vmem>>, vector<4x1xf32>
    tpu.vector_store %arg9[%c0_177, %c164_178], %134 {strides = array<i32>} : memref<4x328xf32, #tpu.memory_space<vmem>>, vector<4x1xf32>,
    %136 = vector.extract_strided_slice %124 {offsets = [0, 72], sizes = [4, 72], strides = [1, 1]} : vector<4x288xf32> to vector<4x72xf32>
    %c0_179 = arith.constant 0 : index
    %c165_180 = arith.constant 165 : index
    %137 = vector.load %arg9[%c0_179, %c165_180] : memref<4x328xf32, #tpu.memory_space<vmem>>, vector<4x72xf32>
    tpu.vector_store %arg9[%c0_179, %c165_180], %136 {strides = array<i32>} : memref<4x328xf32, #tpu.memory_space<vmem>>, vector<4x72xf32>,
    %138 = vector.extract_strided_slice %5 {offsets = [0, 0], sizes = [4, 9], strides = [1, 1]} : vector<4x10xf32> to vector<4x9xf32>
    %c0_181 = arith.constant 0 : index
    %c237 = arith.constant 237 : index
    %139 = vector.load %arg9[%c0_181, %c237] : memref<4x328xf32, #tpu.memory_space<vmem>>, vector<4x9xf32>
    tpu.vector_store %arg9[%c0_181, %c237], %138 {strides = array<i32>} : memref<4x328xf32, #tpu.memory_space<vmem>>, vector<4x9xf32>,
    %140 = vector.extract_strided_slice %124 {offsets = [0, 0], sizes = [4, 72], strides = [1, 1]} : vector<4x288xf32> to vector<4x72xf32>
    %c0_182 = arith.constant 0 : index
    %c246_183 = arith.constant 246 : index
    %141 = vector.load %arg9[%c0_182, %c246_183] : memref<4x328xf32, #tpu.memory_space<vmem>>, vector<4x72xf32>
    tpu.vector_store %arg9[%c0_182, %c246_183], %140 {strides = array<i32>} : memref<4x328xf32, #tpu.memory_space<vmem>>, vector<4x72xf32>,
    %c0_184 = arith.constant 0 : index
    %c318 = arith.constant 318 : index
    %142 = vector.load %arg9[%c0_184, %c318] : memref<4x328xf32, #tpu.memory_space<vmem>>, vector<4x10xf32>
    tpu.vector_store %arg9[%c0_184, %c318], %5 {strides = array<i32>} : memref<4x328xf32, #tpu.memory_space<vmem>>, vector<4x10xf32>,
    %c0_185 = arith.constant 0 : index
    %c0_186 = arith.constant 0 : index
    %143 = vector.load %arg9[%c0_185, %c0_186] : memref<4x328xf32, #tpu.memory_space<vmem>>, vector<4x72xf32>
    %c0_187 = arith.constant 0 : index
    %c0_188 = arith.constant 0 : index
    %144 = vector.load %arg8[%c0_187, %c0_188] : memref<36x288xf32, #tpu.memory_space<vmem>>, vector<4x72xf32>
    tpu.vector_store %arg8[%c0_187, %c0_188], %143 {strides = array<i32>} : memref<36x288xf32, #tpu.memory_space<vmem>>, vector<4x72xf32>,
    %c0_189 = arith.constant 0 : index
    %c82_190 = arith.constant 82 : index
    %145 = vector.load %arg9[%c0_189, %c82_190] : memref<4x328xf32, #tpu.memory_space<vmem>>, vector<4x72xf32>
    %c4_191 = arith.constant 4 : index
    %c0_192 = arith.constant 0 : index
    %146 = vector.load %arg8[%c4_191, %c0_192] : memref<36x288xf32, #tpu.memory_space<vmem>>, vector<4x72xf32>
    tpu.vector_store %arg8[%c4_191, %c0_192], %145 {strides = array<i32>} : memref<36x288xf32, #tpu.memory_space<vmem>>, vector<4x72xf32>,
    %c0_193 = arith.constant 0 : index
    %c1_194 = arith.constant 1 : index
    %147 = vector.load %arg9[%c0_193, %c1_194] : memref<4x328xf32, #tpu.memory_space<vmem>>, vector<4x72xf32>
    %c8_195 = arith.constant 8 : index
    %c0_196 = arith.constant 0 : index
    %148 = vector.load %arg8[%c8_195, %c0_196] : memref<36x288xf32, #tpu.memory_space<vmem>>, vector<4x72xf32>
    tpu.vector_store %arg8[%c8_195, %c0_196], %147 {strides = array<i32>} : memref<36x288xf32, #tpu.memory_space<vmem>>, vector<4x72xf32>,
    %c0_197 = arith.constant 0 : index
    %c164_198 = arith.constant 164 : index
    %149 = vector.load %arg9[%c0_197, %c164_198] : memref<4x328xf32, #tpu.memory_space<vmem>>, vector<4x72xf32>
    %c12_199 = arith.constant 12 : index
    %c0_200 = arith.constant 0 : index
    %150 = vector.load %arg8[%c12_199, %c0_200] : memref<36x288xf32, #tpu.memory_space<vmem>>, vector<4x72xf32>
    tpu.vector_store %arg8[%c12_199, %c0_200], %149 {strides = array<i32>} : memref<36x288xf32, #tpu.memory_space<vmem>>, vector<4x72xf32>,
    %c0_201 = arith.constant 0 : index
    %c246_202 = arith.constant 246 : index
    %151 = vector.load %arg9[%c0_201, %c246_202] : memref<4x328xf32, #tpu.memory_space<vmem>>, vector<4x72xf32>
    %c16_203 = arith.constant 16 : index
    %c0_204 = arith.constant 0 : index
    %152 = vector.load %arg8[%c16_203, %c0_204] : memref<36x288xf32, #tpu.memory_space<vmem>>, vector<4x72xf32>
    tpu.vector_store %arg8[%c16_203, %c0_204], %151 {strides = array<i32>} : memref<36x288xf32, #tpu.memory_space<vmem>>, vector<4x72xf32>,
    %c0_205 = arith.constant 0 : index
    %c165_206 = arith.constant 165 : index
    %153 = vector.load %arg9[%c0_205, %c165_206] : memref<4x328xf32, #tpu.memory_space<vmem>>, vector<4x72xf32>
    %c20_207 = arith.constant 20 : index
    %c0_208 = arith.constant 0 : index
    %154 = vector.load %arg8[%c20_207, %c0_208] : memref<36x288xf32, #tpu.memory_space<vmem>>, vector<4x72xf32>
    tpu.vector_store %arg8[%c20_207, %c0_208], %153 {strides = array<i32>} : memref<36x288xf32, #tpu.memory_space<vmem>>, vector<4x72xf32>,
    %c0_209 = arith.constant 0 : index
    %c9_210 = arith.constant 9 : index
    %155 = vector.load %arg9[%c0_209, %c9_210] : memref<4x328xf32, #tpu.memory_space<vmem>>, vector<4x72xf32>
    %c24_211 = arith.constant 24 : index
    %c0_212 = arith.constant 0 : index
    %156 = vector.load %arg8[%c24_211, %c0_212] : memref<36x288xf32, #tpu.memory_space<vmem>>, vector<4x72xf32>
    tpu.vector_store %arg8[%c24_211, %c0_212], %155 {strides = array<i32>} : memref<36x288xf32, #tpu.memory_space<vmem>>, vector<4x72xf32>,
    %c0_213 = arith.constant 0 : index
    %c91_214 = arith.constant 91 : index
    %157 = vector.load %arg9[%c0_213, %c91_214] : memref<4x328xf32, #tpu.memory_space<vmem>>, vector<4x72xf32>
    %c28_215 = arith.constant 28 : index
    %c0_216 = arith.constant 0 : index
    %158 = vector.load %arg8[%c28_215, %c0_216] : memref<36x288xf32, #tpu.memory_space<vmem>>, vector<4x72xf32>
    tpu.vector_store %arg8[%c28_215, %c0_216], %157 {strides = array<i32>} : memref<36x288xf32, #tpu.memory_space<vmem>>, vector<4x72xf32>,
    %c0_217 = arith.constant 0 : index
    %c10_218 = arith.constant 10 : index
    %159 = vector.load %arg9[%c0_217, %c10_218] : memref<4x328xf32, #tpu.memory_space<vmem>>, vector<4x72xf32>
    %c32_219 = arith.constant 32 : index
    %c0_220 = arith.constant 0 : index
    %160 = vector.load %arg8[%c32_219, %c0_220] : memref<36x288xf32, #tpu.memory_space<vmem>>, vector<4x72xf32>
    tpu.vector_store %arg8[%c32_219, %c0_220], %159 {strides = array<i32>} : memref<36x288xf32, #tpu.memory_space<vmem>>, vector<4x72xf32>,
    %c0_221 = arith.constant 0 : index
    %c82_222 = arith.constant 82 : index
    %161 = vector.load %arg9[%c0_221, %c82_222] : memref<4x328xf32, #tpu.memory_space<vmem>>, vector<4x72xf32>
    %c0_223 = arith.constant 0 : index
    %c72_224 = arith.constant 72 : index
    %162 = vector.load %arg8[%c0_223, %c72_224] : memref<36x288xf32, #tpu.memory_space<vmem>>, vector<4x72xf32>
    tpu.vector_store %arg8[%c0_223, %c72_224], %161 {strides = array<i32>} : memref<36x288xf32, #tpu.memory_space<vmem>>, vector<4x72xf32>,
    %c0_225 = arith.constant 0 : index
    %c1_226 = arith.constant 1 : index
    %163 = vector.load %arg9[%c0_225, %c1_226] : memref<4x328xf32, #tpu.memory_space<vmem>>, vector<4x72xf32>
    %c4_227 = arith.constant 4 : index
    %c72_228 = arith.constant 72 : index
    %164 = vector.load %arg8[%c4_227, %c72_228] : memref<36x288xf32, #tpu.memory_space<vmem>>, vector<4x72xf32>
    tpu.vector_store %arg8[%c4_227, %c72_228], %163 {strides = array<i32>} : memref<36x288xf32, #tpu.memory_space<vmem>>, vector<4x72xf32>,
    %c0_229 = arith.constant 0 : index
    %c83_230 = arith.constant 83 : index
    %165 = vector.load %arg9[%c0_229, %c83_230] : memref<4x328xf32, #tpu.memory_space<vmem>>, vector<4x72xf32>
    %c8_231 = arith.constant 8 : index
    %c72_232 = arith.constant 72 : index
    %166 = vector.load %arg8[%c8_231, %c72_232] : memref<36x288xf32, #tpu.memory_space<vmem>>, vector<4x72xf32>
    tpu.vector_store %arg8[%c8_231, %c72_232], %165 {strides = array<i32>} : memref<36x288xf32, #tpu.memory_space<vmem>>, vector<4x72xf32>,
    %c0_233 = arith.constant 0 : index
    %c246_234 = arith.constant 246 : index
    %167 = vector.load %arg9[%c0_233, %c246_234] : memref<4x328xf32, #tpu.memory_space<vmem>>, vector<4x72xf32>
    %c12_235 = arith.constant 12 : index
    %c72_236 = arith.constant 72 : index
    %168 = vector.load %arg8[%c12_235, %c72_236] : memref<36x288xf32, #tpu.memory_space<vmem>>, vector<4x72xf32>
    tpu.vector_store %arg8[%c12_235, %c72_236], %167 {strides = array<i32>} : memref<36x288xf32, #tpu.memory_space<vmem>>, vector<4x72xf32>,
    %c0_237 = arith.constant 0 : index
    %c165_238 = arith.constant 165 : index
    %169 = vector.load %arg9[%c0_237, %c165_238] : memref<4x328xf32, #tpu.memory_space<vmem>>, vector<4x72xf32>
    %c16_239 = arith.constant 16 : index
    %c72_240 = arith.constant 72 : index
    %170 = vector.load %arg8[%c16_239, %c72_240] : memref<36x288xf32, #tpu.memory_space<vmem>>, vector<4x72xf32>
    tpu.vector_store %arg8[%c16_239, %c72_240], %169 {strides = array<i32>} : memref<36x288xf32, #tpu.memory_space<vmem>>, vector<4x72xf32>,
    %c0_241 = arith.constant 0 : index
    %c247_242 = arith.constant 247 : index
    %171 = vector.load %arg9[%c0_241, %c247_242] : memref<4x328xf32, #tpu.memory_space<vmem>>, vector<4x72xf32>
    %c20_243 = arith.constant 20 : index
    %c72_244 = arith.constant 72 : index
    %172 = vector.load %arg8[%c20_243, %c72_244] : memref<36x288xf32, #tpu.memory_space<vmem>>, vector<4x72xf32>
    tpu.vector_store %arg8[%c20_243, %c72_244], %171 {strides = array<i32>} : memref<36x288xf32, #tpu.memory_space<vmem>>, vector<4x72xf32>,
    %c0_245 = arith.constant 0 : index
    %c91_246 = arith.constant 91 : index
    %173 = vector.load %arg9[%c0_245, %c91_246] : memref<4x328xf32, #tpu.memory_space<vmem>>, vector<4x72xf32>
    %c24_247 = arith.constant 24 : index
    %c72_248 = arith.constant 72 : index
    %174 = vector.load %arg8[%c24_247, %c72_248] : memref<36x288xf32, #tpu.memory_space<vmem>>, vector<4x72xf32>
    tpu.vector_store %arg8[%c24_247, %c72_248], %173 {strides = array<i32>} : memref<36x288xf32, #tpu.memory_space<vmem>>, vector<4x72xf32>,
    %c0_249 = arith.constant 0 : index
    %c10_250 = arith.constant 10 : index
    %175 = vector.load %arg9[%c0_249, %c10_250] : memref<4x328xf32, #tpu.memory_space<vmem>>, vector<4x72xf32>
    %c28_251 = arith.constant 28 : index
    %c72_252 = arith.constant 72 : index
    %176 = vector.load %arg8[%c28_251, %c72_252] : memref<36x288xf32, #tpu.memory_space<vmem>>, vector<4x72xf32>
    tpu.vector_store %arg8[%c28_251, %c72_252], %175 {strides = array<i32>} : memref<36x288xf32, #tpu.memory_space<vmem>>, vector<4x72xf32>,
    %c0_253 = arith.constant 0 : index
    %c92_254 = arith.constant 92 : index
    %177 = vector.load %arg9[%c0_253, %c92_254] : memref<4x328xf32, #tpu.memory_space<vmem>>, vector<4x72xf32>
    %c32_255 = arith.constant 32 : index
    %c72_256 = arith.constant 72 : index
    %178 = vector.load %arg8[%c32_255, %c72_256] : memref<36x288xf32, #tpu.memory_space<vmem>>, vector<4x72xf32>
    tpu.vector_store %arg8[%c32_255, %c72_256], %177 {strides = array<i32>} : memref<36x288xf32, #tpu.memory_space<vmem>>, vector<4x72xf32>,
    %c0_257 = arith.constant 0 : index
    %c164_258 = arith.constant 164 : index
    %179 = vector.load %arg9[%c0_257, %c164_258] : memref<4x328xf32, #tpu.memory_space<vmem>>, vector<4x72xf32>
    %c0_259 = arith.constant 0 : index
    %c144_260 = arith.constant 144 : index
    %180 = vector.load %arg8[%c0_259, %c144_260] : memref<36x288xf32, #tpu.memory_space<vmem>>, vector<4x72xf32>
    tpu.vector_store %arg8[%c0_259, %c144_260], %179 {strides = array<i32>} : memref<36x288xf32, #tpu.memory_space<vmem>>, vector<4x72xf32>,
    %c0_261 = arith.constant 0 : index
    %c246_262 = arith.constant 246 : index
    %181 = vector.load %arg9[%c0_261, %c246_262] : memref<4x328xf32, #tpu.memory_space<vmem>>, vector<4x72xf32>
    %c4_263 = arith.constant 4 : index
    %c144_264 = arith.constant 144 : index
    %182 = vector.load %arg8[%c4_263, %c144_264] : memref<36x288xf32, #tpu.memory_space<vmem>>, vector<4x72xf32>
    tpu.vector_store %arg8[%c4_263, %c144_264], %181 {strides = array<i32>} : memref<36x288xf32, #tpu.memory_space<vmem>>, vector<4x72xf32>,
    %c0_265 = arith.constant 0 : index
    %c165_266 = arith.constant 165 : index
    %183 = vector.load %arg9[%c0_265, %c165_266] : memref<4x328xf32, #tpu.memory_space<vmem>>, vector<4x72xf32>
    %c8_267 = arith.constant 8 : index
    %c144_268 = arith.constant 144 : index
    %184 = vector.load %arg8[%c8_267, %c144_268] : memref<36x288xf32, #tpu.memory_space<vmem>>, vector<4x72xf32>
    tpu.vector_store %arg8[%c8_267, %c144_268], %183 {strides = array<i32>} : memref<36x288xf32, #tpu.memory_space<vmem>>, vector<4x72xf32>,
    %c0_269 = arith.constant 0 : index
    %c9_270 = arith.constant 9 : index
    %185 = vector.load %arg9[%c0_269, %c9_270] : memref<4x328xf32, #tpu.memory_space<vmem>>, vector<4x72xf32>
    %c12_271 = arith.constant 12 : index
    %c144_272 = arith.constant 144 : index
    %186 = vector.load %arg8[%c12_271, %c144_272] : memref<36x288xf32, #tpu.memory_space<vmem>>, vector<4x72xf32>
    tpu.vector_store %arg8[%c12_271, %c144_272], %185 {strides = array<i32>} : memref<36x288xf32, #tpu.memory_space<vmem>>, vector<4x72xf32>,
    %c0_273 = arith.constant 0 : index
    %c91_274 = arith.constant 91 : index
    %187 = vector.load %arg9[%c0_273, %c91_274] : memref<4x328xf32, #tpu.memory_space<vmem>>, vector<4x72xf32>
    %c16_275 = arith.constant 16 : index
    %c144_276 = arith.constant 144 : index
    %188 = vector.load %arg8[%c16_275, %c144_276] : memref<36x288xf32, #tpu.memory_space<vmem>>, vector<4x72xf32>
    tpu.vector_store %arg8[%c16_275, %c144_276], %187 {strides = array<i32>} : memref<36x288xf32, #tpu.memory_space<vmem>>, vector<4x72xf32>,
    %c0_277 = arith.constant 0 : index
    %c10_278 = arith.constant 10 : index
    %189 = vector.load %arg9[%c0_277, %c10_278] : memref<4x328xf32, #tpu.memory_space<vmem>>, vector<4x72xf32>
    %c20_279 = arith.constant 20 : index
    %c144_280 = arith.constant 144 : index
    %190 = vector.load %arg8[%c20_279, %c144_280] : memref<36x288xf32, #tpu.memory_space<vmem>>, vector<4x72xf32>
    tpu.vector_store %arg8[%c20_279, %c144_280], %189 {strides = array<i32>} : memref<36x288xf32, #tpu.memory_space<vmem>>, vector<4x72xf32>,
    %c0_281 = arith.constant 0 : index
    %c173_282 = arith.constant 173 : index
    %191 = vector.load %arg9[%c0_281, %c173_282] : memref<4x328xf32, #tpu.memory_space<vmem>>, vector<4x72xf32>
    %c24_283 = arith.constant 24 : index
    %c144_284 = arith.constant 144 : index
    %192 = vector.load %arg8[%c24_283, %c144_284] : memref<36x288xf32, #tpu.memory_space<vmem>>, vector<4x72xf32>
    tpu.vector_store %arg8[%c24_283, %c144_284], %191 {strides = array<i32>} : memref<36x288xf32, #tpu.memory_space<vmem>>, vector<4x72xf32>,
    %c0_285 = arith.constant 0 : index
    %c255_286 = arith.constant 255 : index
    %193 = vector.load %arg9[%c0_285, %c255_286] : memref<4x328xf32, #tpu.memory_space<vmem>>, vector<4x72xf32>
    %c28_287 = arith.constant 28 : index
    %c144_288 = arith.constant 144 : index
    %194 = vector.load %arg8[%c28_287, %c144_288] : memref<36x288xf32, #tpu.memory_space<vmem>>, vector<4x72xf32>
    tpu.vector_store %arg8[%c28_287, %c144_288], %193 {strides = array<i32>} : memref<36x288xf32, #tpu.memory_space<vmem>>, vector<4x72xf32>,
    %c0_289 = arith.constant 0 : index
    %c174_290 = arith.constant 174 : index
    %195 = vector.load %arg9[%c0_289, %c174_290] : memref<4x328xf32, #tpu.memory_space<vmem>>, vector<4x72xf32>
    %c32_291 = arith.constant 32 : index
    %c144_292 = arith.constant 144 : index
    %196 = vector.load %arg8[%c32_291, %c144_292] : memref<36x288xf32, #tpu.memory_space<vmem>>, vector<4x72xf32>
    tpu.vector_store %arg8[%c32_291, %c144_292], %195 {strides = array<i32>} : memref<36x288xf32, #tpu.memory_space<vmem>>, vector<4x72xf32>,
    %c0_293 = arith.constant 0 : index
    %c246_294 = arith.constant 246 : index
    %197 = vector.load %arg9[%c0_293, %c246_294] : memref<4x328xf32, #tpu.memory_space<vmem>>, vector<4x72xf32>
    %c0_295 = arith.constant 0 : index
    %c216_296 = arith.constant 216 : index
    %198 = vector.load %arg8[%c0_295, %c216_296] : memref<36x288xf32, #tpu.memory_space<vmem>>, vector<4x72xf32>
    tpu.vector_store %arg8[%c0_295, %c216_296], %197 {strides = array<i32>} : memref<36x288xf32, #tpu.memory_space<vmem>>, vector<4x72xf32>,
    %c0_297 = arith.constant 0 : index
    %c165_298 = arith.constant 165 : index
    %199 = vector.load %arg9[%c0_297, %c165_298] : memref<4x328xf32, #tpu.memory_space<vmem>>, vector<4x72xf32>
    %c4_299 = arith.constant 4 : index
    %c216_300 = arith.constant 216 : index
    %200 = vector.load %arg8[%c4_299, %c216_300] : memref<36x288xf32, #tpu.memory_space<vmem>>, vector<4x72xf32>
    tpu.vector_store %arg8[%c4_299, %c216_300], %199 {strides = array<i32>} : memref<36x288xf32, #tpu.memory_space<vmem>>, vector<4x72xf32>,
    %c0_301 = arith.constant 0 : index
    %c247_302 = arith.constant 247 : index
    %201 = vector.load %arg9[%c0_301, %c247_302] : memref<4x328xf32, #tpu.memory_space<vmem>>, vector<4x72xf32>
    %c8_303 = arith.constant 8 : index
    %c216_304 = arith.constant 216 : index
    %202 = vector.load %arg8[%c8_303, %c216_304] : memref<36x288xf32, #tpu.memory_space<vmem>>, vector<4x72xf32>
    tpu.vector_store %arg8[%c8_303, %c216_304], %201 {strides = array<i32>} : memref<36x288xf32, #tpu.memory_space<vmem>>, vector<4x72xf32>,
    %c0_305 = arith.constant 0 : index
    %c91_306 = arith.constant 91 : index
    %203 = vector.load %arg9[%c0_305, %c91_306] : memref<4x328xf32, #tpu.memory_space<vmem>>, vector<4x72xf32>
    %c12_307 = arith.constant 12 : index
    %c216_308 = arith.constant 216 : index
    %204 = vector.load %arg8[%c12_307, %c216_308] : memref<36x288xf32, #tpu.memory_space<vmem>>, vector<4x72xf32>
    tpu.vector_store %arg8[%c12_307, %c216_308], %203 {strides = array<i32>} : memref<36x288xf32, #tpu.memory_space<vmem>>, vector<4x72xf32>,
    %c0_309 = arith.constant 0 : index
    %c10_310 = arith.constant 10 : index
    %205 = vector.load %arg9[%c0_309, %c10_310] : memref<4x328xf32, #tpu.memory_space<vmem>>, vector<4x72xf32>
    %c16_311 = arith.constant 16 : index
    %c216_312 = arith.constant 216 : index
    %206 = vector.load %arg8[%c16_311, %c216_312] : memref<36x288xf32, #tpu.memory_space<vmem>>, vector<4x72xf32>
    tpu.vector_store %arg8[%c16_311, %c216_312], %205 {strides = array<i32>} : memref<36x288xf32, #tpu.memory_space<vmem>>, vector<4x72xf32>,
    %c0_313 = arith.constant 0 : index
    %c92_314 = arith.constant 92 : index
    %207 = vector.load %arg9[%c0_313, %c92_314] : memref<4x328xf32, #tpu.memory_space<vmem>>, vector<4x72xf32>
    %c20_315 = arith.constant 20 : index
    %c216_316 = arith.constant 216 : index
    %208 = vector.load %arg8[%c20_315, %c216_316] : memref<36x288xf32, #tpu.memory_space<vmem>>, vector<4x72xf32>
    tpu.vector_store %arg8[%c20_315, %c216_316], %207 {strides = array<i32>} : memref<36x288xf32, #tpu.memory_space<vmem>>, vector<4x72xf32>,
    %c0_317 = arith.constant 0 : index
    %c255_318 = arith.constant 255 : index
    %209 = vector.load %arg9[%c0_317, %c255_318] : memref<4x328xf32, #tpu.memory_space<vmem>>, vector<4x72xf32>
    %c24_319 = arith.constant 24 : index
    %c216_320 = arith.constant 216 : index
    %210 = vector.load %arg8[%c24_319, %c216_320] : memref<36x288xf32, #tpu.memory_space<vmem>>, vector<4x72xf32>
    tpu.vector_store %arg8[%c24_319, %c216_320], %209 {strides = array<i32>} : memref<36x288xf32, #tpu.memory_space<vmem>>, vector<4x72xf32>,
    %c0_321 = arith.constant 0 : index
    %c174_322 = arith.constant 174 : index
    %211 = vector.load %arg9[%c0_321, %c174_322] : memref<4x328xf32, #tpu.memory_space<vmem>>, vector<4x72xf32>
    %c28_323 = arith.constant 28 : index
    %c216_324 = arith.constant 216 : index
    %212 = vector.load %arg8[%c28_323, %c216_324] : memref<36x288xf32, #tpu.memory_space<vmem>>, vector<4x72xf32>
    tpu.vector_store %arg8[%c28_323, %c216_324], %211 {strides = array<i32>} : memref<36x288xf32, #tpu.memory_space<vmem>>, vector<4x72xf32>,
    %c0_325 = arith.constant 0 : index
    %c256_326 = arith.constant 256 : index
    %213 = vector.load %arg9[%c0_325, %c256_326] : memref<4x328xf32, #tpu.memory_space<vmem>>, vector<4x72xf32>
    %c32_327 = arith.constant 32 : index
    %c216_328 = arith.constant 216 : index
    %214 = vector.load %arg8[%c32_327, %c216_328] : memref<36x288xf32, #tpu.memory_space<vmem>>, vector<4x72xf32>
    tpu.vector_store %arg8[%c32_327, %c216_328], %213 {strides = array<i32>} : memref<36x288xf32, #tpu.memory_space<vmem>>, vector<4x72xf32>,
    %c0_329 = arith.constant 0 : index
    %c0_330 = arith.constant 0 : index
    %215 = vector.load %arg8[%c0_329, %c0_330] : memref<36x288xf32, #tpu.memory_space<vmem>>, vector<36x288xf32>
    %cst_331 = arith.constant dense<0.000000e+00> : vector<8x288xf32>
    %216 = tpu.matmul %1, %215, %cst_331 {dimension_numbers = #tpu.dot_dimension_numbers<[1], [0], [0], [1], [0, 0, 1, 1], [], []>} : vector<8x36xf32>, vector<36x288xf32>, vector<8x288xf32> -> vector<8x288xf32>
    %217 = vector.broadcast %3 : vector<8x1xf32> to vector<8x288xf32>
    %218 = arith.addf %216, %217 : vector<8x288xf32>
    %cst_332 = arith.constant 0.000000e+00 : f32
    %219 = vector.broadcast %cst_332 : f32 to vector<8x288xf32>
    %220 = arith.cmpf ogt, %218, %219 : vector<8x288xf32>
    %cst_333 = arith.constant 2.000000e-01 : f32
    %221 = vector.broadcast %cst_333 : f32 to vector<8x288xf32>
    %222 = arith.mulf %221, %218 : vector<8x288xf32>
    %223 = arith.select %220, %218, %222 : vector<8x288xi1>, vector<8x288xf32>
    %224 = vector.extract_strided_slice %223 {offsets = [0, 0], sizes = [8, 72], strides = [1, 1]} : vector<8x288xf32> to vector<8x72xf32>
    %225 = vector.extract_strided_slice %223 {offsets = [0, 72], sizes = [8, 72], strides = [1, 1]} : vector<8x288xf32> to vector<8x72xf32>
    %226 = arith.addf %224, %225 : vector<8x72xf32>
    %227 = vector.extract_strided_slice %223 {offsets = [0, 144], sizes = [8, 72], strides = [1, 1]} : vector<8x288xf32> to vector<8x72xf32>
    %228 = arith.addf %226, %227 : vector<8x72xf32>
    %229 = vector.extract_strided_slice %223 {offsets = [0, 216], sizes = [8, 72], strides = [1, 1]} : vector<8x288xf32> to vector<8x72xf32>
    %230 = arith.addf %228, %229 : vector<8x72xf32>
    %cst_334 = arith.constant 2.500000e-01 : f32
    %231 = vector.broadcast %cst_334 : f32 to vector<8x72xf32>
    %232 = arith.mulf %231, %230 : vector<8x72xf32>
    %c0_335 = arith.constant 0 : index
    %c0_336 = arith.constant 0 : index
    %c0_337 = arith.constant 0 : index
    %233 = vector.load %arg7[%c0_335, %c0_336, %c0_337] : memref<1x8x72xf32, #tpu.memory_space<vmem>>, vector<1x8x72xf32>
    %234 = vector.shape_cast %233 : vector<1x8x72xf32> to vector<8x72xf32>
    %235 = vector.shape_cast %232 : vector<8x72xf32> to vector<1x8x72xf32>
    tpu.vector_store %arg7[%c0_335, %c0_336, %c0_337], %235 {strides = array<i32>} : memref<1x8x72xf32, #tpu.memory_space<vmem>>, vector<1x8x72xf32>,
    return
  }
  func.func @transform_0(%arg0: i32) -> (i32, i32, i32) {
    %c0_i32 = arith.constant 0 : i32
    %c0_i32_0 = arith.constant 0 : i32
    %c0_i32_1 = arith.constant 0 : i32
    return %arg0, %c0_i32, %c0_i32_0 : i32, i32, i32
  }
  func.func @transform_1(%arg0: i32) -> (i32, i32) {
    %c0_i32 = arith.constant 0 : i32
    %c0_i32_0 = arith.constant 0 : i32
    %c0_i32_1 = arith.constant 0 : i32
    return %c0_i32, %c0_i32_0 : i32, i32
  }
  func.func @transform_2(%arg0: i32) -> (i32, i32) {
    %c0_i32 = arith.constant 0 : i32
    %c0_i32_0 = arith.constant 0 : i32
    %c0_i32_1 = arith.constant 0 : i32
    return %c0_i32, %c0_i32_0 : i32, i32
  }
  func.func @transform_3(%arg0: i32) -> (i32, i32) {
    %c0_i32 = arith.constant 0 : i32
    %c0_i32_0 = arith.constant 0 : i32
    %c0_i32_1 = arith.constant 0 : i32
    return %c0_i32, %c0_i32_0 : i32, i32
  }
  func.func @transform_4(%arg0: i32) -> (i32, i32) {
    %c0_i32 = arith.constant 0 : i32
    %c0_i32_0 = arith.constant 0 : i32
    %c0_i32_1 = arith.constant 0 : i32
    return %c0_i32, %c0_i32_0 : i32, i32
  }
  func.func @transform_5(%arg0: i32) -> (i32, i32) {
    %c0_i32 = arith.constant 0 : i32
    %c0_i32_0 = arith.constant 0 : i32
    %c0_i32_1 = arith.constant 0 : i32
    return %c0_i32, %c0_i32_0 : i32, i32
  }
  func.func @transform_6(%arg0: i32) -> (i32, i32, i32) {
    %c0_i32 = arith.constant 0 : i32
    %c0_i32_0 = arith.constant 0 : i32
    %c0_i32_1 = arith.constant 0 : i32
    return %arg0, %c0_i32, %c0_i32_0 : i32, i32, i32
  }
}

</mosaic_0001>

<llo_original>
// kernel: tile.8
$region0: #{tile.8}
  #allocation0 [shape = 's32[1]{0}', space=sflag, size = 0x4, scoped, tag = 'scoped memory for tile.8']
  %s0 = inlined_call_operand.vmem [shape: f32[72], index: 0, kind: input, shape index: {}]
  %s1 = inlined_call_operand.vmem [shape: f32[4,72], index: 1, kind: output, shape index: {}]
  // Predicated region
  $region2: #{tile.8} parent=0 // pred_check
    _
  $region3: #{tile.8} parent=0 // pred_check_branch
    %3 = sbr.rel (0) target = $region5
  $region4: #{tile.8} parent=0 // pred_region
    _
  $region5: #{tile.8} parent=0 // pred_fallthru
    _
  %v4 = vld [vmem:[%s0] ss:$0 sm:$0xff]
  %5 = vst [vmem:[%s1] sm:$0xf] %v4

// kernel: tile.9
$region0: #{tile.9}
  %s0 = inlined_call_operand.vmem [shape: f32[4,72], index: 0, kind: input, shape index: {}]
  %s1 = inlined_call_operand.vmem [shape: f32[1,288], index: 1, kind: output, shape index: {}]
  $region1: #{tile.9} parent=0
    #allocation0 [shape = 'u8[12288]{0}', space=vmem, size = 0x3000, scoped, tag = 'scoped mem for output reshape']
    #allocation1 [shape = 'u8[4096]{0}', space=vmem, size = 0x1000, scoped, tag = 'scoped mem for input reshape']
    %s3 = sshll.u32 1, 4
    %s4 = ssub.s32 %s3, 1
    %v5 = vld [vmem:[%s0] sm:%s4]
    %6 = vst [vmem:[#allocation1] sm:%s4] %v5
    %v7 = vld [vmem:[#allocation1] sm:$0x1]
    %vm8 = vcmask 588800
    %9 = vst.msk [vmem:[#allocation0] sm:$0x1] %vm8, %v7
    %s10 = scalar_lea.vmem [#allocation1], 3
    %v11 = vld [vmem:[%s10] sm:$0x1]
    %s12 = scalar_lea.vmem [#allocation1], 3
    %v13 = vld [vmem:[%s12] sm:$0x1]
    %vm14 = vcmask 326656
    %v15 = vsel %vm14, %v13, %v11
    %16 = vrot.lane.b32.xlu0 %v15, 88
    %v17 = vpop.permute.xlu0 %16
    %vm18 = vcmask 261120
    %s19 = scalar_lea.vmem [#allocation0], 16
    %20 = vst.msk [vmem:[%s19] sm:$0x1] %vm18, %v17
    %vm21 = vcmask 1048256
    %s22 = scalar_lea.vmem [#allocation0], 8
    %23 = vst.msk [vmem:[%s22] sm:$0x1] %vm21, %v17
    %s24 = scalar_lea.vmem [#allocation1], 1
    %v25 = vld [vmem:[%s24] sm:$0x1]
    %s26 = scalar_lea.vmem [#allocation1], 1
    %v27 = vld [vmem:[%s26] sm:$0x1]
    %vm28 = vcmask 457728
    %v29 = vsel %vm28, %v27, %v25
    %30 = vrot.lane.b32.xlu0 %v29, 72
    %v31 = vpop.permute.xlu0 %30
    %vm32 = vcmask 130048
    %s33 = scalar_lea.vmem [#allocation0], 8
    %34 = vst.msk [vmem:[%s33] sm:$0x1] %vm32, %v31
    %vm35 = vcmask 1048128
    %36 = vst.msk [vmem:[#allocation0] sm:$0x1] %vm35, %v31
    %s37 = scalar_lea.vmem [#allocation1], 2
    %v38 = vld [vmem:[%s37] sm:$0x1]
    %39 = vrot.lane.b32.xlu0 %v38, 16
    %v40 = vpop.permute.xlu0 %39
    %vm41 = vcmask 720000
    %s42 = scalar_lea.vmem [#allocation0], 8
    %43 = vst.msk [vmem:[%s42] sm:$0x1] %vm41, %v40
    %s45 = sshll.u32 1, 1
    %s46 = ssub.s32 %s45, 1
    %v48 = vld [vmem:[#allocation0] sm:%s46]
    %s49 = sshll.u32 1, 1
    %s50 = ssub.s32 %s49, 1
    %51 = vst [vmem:[%s1] sm:%s50] %v48
    %s52 = scalar_lea.vmem [#allocation0], 8
    %v53 = vld [vmem:[%s52] sm:%s46]
    %s54 = sshll.u32 1, 1
    %s55 = ssub.s32 %s54, 1
    %s56 = scalar_lea.vmem %s1, 1
    %57 = vst [vmem:[%s56] sm:%s55] %v53
    %s58 = scalar_lea.vmem [#allocation0], 16
    %v59 = vld [vmem:[%s58] sm:%s46]
    %s60 = sshll.u32 1, 1
    %s61 = ssub.s32 %s60, 1
    %s62 = smul.addr 1, 2
    %s63 = scalar_lea.vmem %s1, %s62
    %64 = vst [vmem:[%s63] sm:%s61] %v59

// kernel: discriminator_block.1
$region0: #{discriminator_block.1}
  #allocation0 [shape = 'u32[]', space=smem, size = 0x4, offset = 0x4, fixed_abs, tag = 'smem constant byte address 0x4 - core index']
  #allocation1 [shape = 'u32[144,128]{1,0:T(1,128)}', space=vmem, size = 0x12000, scoped, tag = 'internal scratch']
  #allocation2 [shape = 'f32[36,288]{1,0:T(8,128)}', space=vmem, size = 0xf000, scoped, tag = 'scratch operand']
  #allocation3 [shape = 'f32[4,328]{1,0:T(4,128)}', space=vmem, size = 0x1800, scoped, tag = 'scratch operand']
  %s0 = inlined_call_operand.vmem [shape: f32[2,4,328], index: 0, kind: input, shape index: {}]
  %s1 = inlined_call_operand.vmem [shape: f32[4,36], index: 1, kind: input, shape index: {}]
  %s2 = inlined_call_operand.vmem [shape: f32[4,1], index: 2, kind: input, shape index: {}]
  %s3 = inlined_call_operand.vmem [shape: f32[8,36], index: 3, kind: input, shape index: {}]
  %s4 = inlined_call_operand.vmem [shape: f32[8,1], index: 4, kind: input, shape index: {}]
  %s5 = inlined_call_operand.vmem [shape: f32[1,288], index: 5, kind: input, shape index: {}]
  %s6 = inlined_call_operand.vmem [shape: f32[2,8,72], index: 6, kind: output, shape index: {}]
  %s7 = sld [smem:[#allocation0]]
  $region57: #{discriminator_block.1} parent=0
    _
  %s9 = ssub.s32 1, %s7
  %s10 = scalar_select 0, %s9, %s7
  loop: start=0, step=1, limit=4
  $region2: #{discriminator_block.1} parent=0 // loop_pre_header
    _
  $region3: #{discriminator_block.1} parent=0 // loop_header
    %s12 = sphi 0, %s16
    %p13 = scmp.ge.s32.totalorder %s12, 4
    %s22 = sphi 0, %s24
    %s25 = sphi 0, %s22
    %s26 = sphi 0, %s25
    %s42 = sphi 0, %s26
    %s46 = sphi 0, %s46
    %s48 = sphi 0, %s46
    %s49 = sphi 0, %s48
    %s63 = sphi 0, %s49
    %s67 = sphi 0, %s67
    %s69 = sphi 0, %s67
    %s70 = sphi 0, %s69
    %s84 = sphi 0, %s70
    %s88 = sphi 0, %s88
    %s90 = sphi 0, %s88
    %s91 = sphi 0, %s90
    %s105 = sphi 0, %s91
    %s109 = sphi 0, %s109
    %s111 = sphi 0, %s109
    %s112 = sphi 0, %s111
    %s126 = sphi 0, %s112
    %s130 = sphi 0, %s130
    %s132 = sphi 0, %s130
    %s133 = sphi 0, %s132
    %s147 = sphi 0, %s133
    %s153 = sphi 0, %s155
    %s156 = sphi 0, %s153
    %s157 = sphi 0, %s156
    %s173 = sphi 0, %s157
  $region4: #{discriminator_block.1} parent=0 // loop_header_branch
    %15 = sbr.rel (%p13) target = $region8
  $region5: #{discriminator_block.1} parent=0 // loop_body
    %s17 = ssub.s32 %s12, 1
    %s18 = ssub.s32 %s12, 2
    %s19 = sadd.s32 %s12, 1
    %s20 = ssub.s32 %s12, %s19
    %p21 = scmp.eq.s32.totalorder %s20, 0
    %s23 = sadd.s32 %s22, 1
    %s24 = scalar_select %p21, %s22, %s23
    %p27 = pneg %p21
    %p28 = scmp.eq.s32.totalorder %s12, 1
    %p29 = por %p27, %p28
    %p30 = scmp.ne.s32.totalorder %s22, %s25
    %p31 = scmp.eq.s32.totalorder %s12, 0
    %p32 = por %p30, %p31
    %p33 = scmp.ne.s32.totalorder %s22, %s25
    %p34 = scmp.eq.s32.totalorder %s17, 1
    %p35 = por %p33, %p34
    %p36 = scmp.ne.s32.totalorder %s25, %s26
    %p37 = scmp.eq.s32.totalorder %s17, 0
    %p38 = por %p36, %p37
    %p39 = scmp.ne.s32.totalorder %s25, %s26
    %p40 = scmp.eq.s32.totalorder %s18, 1
    %p41 = por %p39, %p40
    %p43 = scmp.ne.s32.totalorder %s26, %s42
    %p44 = scmp.eq.s32.totalorder %s18, 0
    %p45 = por %p43, %p44
    %s47 = sadd.s32 %s46, 1
    %p50 = scmp.eq.s32.totalorder %s12, 1
    %p51 = scmp.ne.s32.totalorder %s46, %s48
    %p52 = scmp.eq.s32.totalorder %s12, 0
    %p53 = por %p51, %p52
    %p54 = scmp.ne.s32.totalorder %s46, %s48
    %p55 = scmp.eq.s32.totalorder %s17, 1
    %p56 = por %p54, %p55
    %p57 = scmp.ne.s32.totalorder %s48, %s49
    %p58 = scmp.eq.s32.totalorder %s17, 0
    %p59 = por %p57, %p58
    %p60 = scmp.ne.s32.totalorder %s48, %s49
    %p61 = scmp.eq.s32.totalorder %s18, 1
    %p62 = por %p60, %p61
    %p64 = scmp.ne.s32.totalorder %s49, %s63
    %p65 = scmp.eq.s32.totalorder %s18, 0
    %p66 = por %p64, %p65
    %s68 = sadd.s32 %s67, 1
    %p71 = scmp.eq.s32.totalorder %s12, 1
    %p72 = scmp.ne.s32.totalorder %s67, %s69
    %p73 = scmp.eq.s32.totalorder %s12, 0
    %p74 = por %p72, %p73
    %p75 = scmp.ne.s32.totalorder %s67, %s69
    %p76 = scmp.eq.s32.totalorder %s17, 1
    %p77 = por %p75, %p76
    %p78 = scmp.ne.s32.totalorder %s69, %s70
    %p79 = scmp.eq.s32.totalorder %s17, 0
    %p80 = por %p78, %p79
    %p81 = scmp.ne.s32.totalorder %s69, %s70
    %p82 = scmp.eq.s32.totalorder %s18, 1
    %p83 = por %p81, %p82
    %p85 = scmp.ne.s32.totalorder %s70, %s84
    %p86 = scmp.eq.s32.totalorder %s18, 0
    %p87 = por %p85, %p86
    %s89 = sadd.s32 %s88, 1
    %p92 = scmp.eq.s32.totalorder %s12, 1
    %p93 = scmp.ne.s32.totalorder %s88, %s90
    %p94 = scmp.eq.s32.totalorder %s12, 0
    %p95 = por %p93, %p94
    %p96 = scmp.ne.s32.totalorder %s88, %s90
    %p97 = scmp.eq.s32.totalorder %s17, 1
    %p98 = por %p96, %p97
    %p99 = scmp.ne.s32.totalorder %s90, %s91
    %p100 = scmp.eq.s32.totalorder %s17, 0
    %p101 = por %p99, %p100
    %p102 = scmp.ne.s32.totalorder %s90, %s91
    %p103 = scmp.eq.s32.totalorder %s18, 1
    %p104 = por %p102, %p103
    %p106 = scmp.ne.s32.totalorder %s91, %s105
    %p107 = scmp.eq.s32.totalorder %s18, 0
    %p108 = por %p106, %p107
    %s110 = sadd.s32 %s109, 1
    %p113 = scmp.eq.s32.totalorder %s12, 1
    %p114 = scmp.ne.s32.totalorder %s109, %s111
    %p115 = scmp.eq.s32.totalorder %s12, 0
    %p116 = por %p114, %p115
    %p117 = scmp.ne.s32.totalorder %s109, %s111
    %p118 = scmp.eq.s32.totalorder %s17, 1
    %p119 = por %p117, %p118
    %p120 = scmp.ne.s32.totalorder %s111, %s112
    %p121 = scmp.eq.s32.totalorder %s17, 0
    %p122 = por %p120, %p121
    %p123 = scmp.ne.s32.totalorder %s111, %s112
    %p124 = scmp.eq.s32.totalorder %s18, 1
    %p125 = por %p123, %p124
    %p127 = scmp.ne.s32.totalorder %s112, %s126
    %p128 = scmp.eq.s32.totalorder %s18, 0
    %p129 = por %p127, %p128
    %s131 = sadd.s32 %s130, 1
    %p134 = scmp.eq.s32.totalorder %s12, 1
    %p135 = scmp.ne.s32.totalorder %s130, %s132
    %p136 = scmp.eq.s32.totalorder %s12, 0
    %p137 = por %p135, %p136
    %p138 = scmp.ne.s32.totalorder %s130, %s132
    %p139 = scmp.eq.s32.totalorder %s17, 1
    %p140 = por %p138, %p139
    %p141 = scmp.ne.s32.totalorder %s132, %s133
    %p142 = scmp.eq.s32.totalorder %s17, 0
    %p143 = por %p141, %p142
    %p144 = scmp.ne.s32.totalorder %s132, %s133
    %p145 = scmp.eq.s32.totalorder %s18, 1
    %p146 = por %p144, %p145
    %p148 = scmp.ne.s32.totalorder %s133, %s147
    %p149 = scmp.eq.s32.totalorder %s18, 0
    %p150 = por %p148, %p149
    %s151 = ssub.s32 %s12, %s19
    %p152 = scmp.eq.s32.totalorder %s151, 0
    %s154 = sadd.s32 %s153, 1
    %s155 = scalar_select %p152, %s153, %s154
    %p158 = pneg %p152
    %p159 = scmp.eq.s32.totalorder %s12, 1
    %p160 = por %p158, %p159
    %p161 = scmp.ne.s32.totalorder %s153, %s156
    %p162 = scmp.eq.s32.totalorder %s12, 0
    %p163 = por %p161, %p162
    %p164 = scmp.ne.s32.totalorder %s153, %s156
    %p165 = scmp.eq.s32.totalorder %s17, 1
    %p166 = por %p164, %p165
    %p167 = scmp.ne.s32.totalorder %s156, %s157
    %p168 = scmp.eq.s32.totalorder %s17, 0
    %p169 = por %p167, %p168
    %p170 = scmp.ne.s32.totalorder %s156, %s157
    %p171 = scmp.eq.s32.totalorder %s18, 1
    %p172 = por %p170, %p171
    %p174 = scmp.ne.s32.totalorder %s157, %s173
    %p175 = scmp.eq.s32.totalorder %s18, 0
    %p176 = por %p174, %p175
    %p177 = scmp.le.s32.totalorder 1, %s12
    %p178 = scmp.lt.s32.totalorder %s12, 3
    %p179 = pnand %p177, %p178
    %p180 = pneg %p179
    // Predicated region
    $region9: #{discriminator_block.1} parent=5 // pred_check
      _
    $region10: #{discriminator_block.1} parent=5 // pred_check_branch
      %182 = sbr.rel (%p179) target = $region12
    $region11: #{discriminator_block.1} parent=5 // pred_region
      %s183 = ssub.s32 %s12, 1
      // Predicated region
      $region13: #{discriminator_block.1} parent=11 // pred_check
        %p184 = pneg %p59
      $region14: #{discriminator_block.1} parent=11 // pred_check_branch
        %186 = sbr.rel (%p184) target = $region16
      $region15: #{discriminator_block.1} parent=11 // pred_region
        _
      $region16: #{discriminator_block.1} parent=11 // pred_fallthru
        _
      // Predicated region
      $region17: #{discriminator_block.1} parent=11 // pred_check
        %p187 = pneg %p80
      $region18: #{discriminator_block.1} parent=11 // pred_check_branch
        %189 = sbr.rel (%p187) target = $region20
      $region19: #{discriminator_block.1} parent=11 // pred_region
        _
      $region20: #{discriminator_block.1} parent=11 // pred_fallthru
        _
      // Predicated region
      $region21: #{discriminator_block.1} parent=11 // pred_check
        %p190 = pneg %p101
      $region22: #{discriminator_block.1} parent=11 // pred_check_branch
        %192 = sbr.rel (%p190) target = $region24
      $region23: #{discriminator_block.1} parent=11 // pred_region
        _
      $region24: #{discriminator_block.1} parent=11 // pred_fallthru
        _
      // Predicated region
      $region25: #{discriminator_block.1} parent=11 // pred_check
        %p193 = pneg %p122
      $region26: #{discriminator_block.1} parent=11 // pred_check_branch
        %195 = sbr.rel (%p193) target = $region28
      $region27: #{discriminator_block.1} parent=11 // pred_region
        _
      $region28: #{discriminator_block.1} parent=11 // pred_fallthru
        _
      // Predicated region
      $region29: #{discriminator_block.1} parent=11 // pred_check
        %p196 = pneg %p143
      $region30: #{discriminator_block.1} parent=11 // pred_check_branch
        %198 = sbr.rel (%p196) target = $region32
      $region31: #{discriminator_block.1} parent=11 // pred_region
        _
      $region32: #{discriminator_block.1} parent=11 // pred_fallthru
        _
    $region12: #{discriminator_block.1} parent=5 // pred_fallthru
      _
    %p199 = scmp.lt.s32.totalorder %s12, 2
    // Predicated region
    $region33: #{discriminator_block.1} parent=5 // pred_check
      %p200 = pneg %p199
    $region34: #{discriminator_block.1} parent=5 // pred_check_branch
      %202 = sbr.rel (%p200) target = $region36
    $region35: #{discriminator_block.1} parent=5 // pred_region
      // Predicated region
      $region37: #{discriminator_block.1} parent=35 // pred_check
        %p203 = pneg %p32
      $region38: #{discriminator_block.1} parent=35 // pred_check_branch
        %205 = sbr.rel (%p203) target = $region40
      $region39: #{discriminator_block.1} parent=35 // pred_region
        %p206 = scmp.lt.s32.totalorder %s12, 1
        %s207 = scalar_select %p206, %s12, 1
        %s208 = smul.addr %s207, 3
        %s209 = smul.addr %s208, 4
        %s210 = scalar_lea.vmem %s0, %s209
      $region40: #{discriminator_block.1} parent=35 // pred_fallthru
        _
    $region36: #{discriminator_block.1} parent=5 // pred_fallthru
      _
    %p211 = scmp.le.s32.totalorder 1, %s12
    %p212 = scmp.lt.s32.totalorder %s12, 3
    %p213 = pnand %p211, %p212
    %p214 = pneg %p213
    // Predicated region
    $region41: #{discriminator_block.1} parent=5 // pred_check
      _
    $region42: #{discriminator_block.1} parent=5 // pred_check_branch
      %216 = sbr.rel (%p213) target = $region44
    $region43: #{discriminator_block.1} parent=5 // pred_region
      %s217 = ssub.s32 %s12, 1
      %p218 = scmp.lt.s32.totalorder %s17, 1
      %s219 = scalar_select %p218, %s17, 1
      %s220 = smul.addr %s219, 3
      %s221 = smul.addr %s220, 4
      %s222 = scalar_lea.vmem %s0, %s221
      %p223 = pneg %p38
      %p224 = pneg %p35
      %p225 = pneg %p59
      %p226 = pneg %p56
      %p227 = pneg %p80
      %p228 = pneg %p77
      %p229 = pneg %p101
      %p230 = pneg %p98
      %p231 = pneg %p122
      %p232 = pneg %p119
      %p233 = pneg %p143
      %p234 = pneg %p140
      %p235 = pneg %p169
      %p236 = pneg %p166
      %p237 = scmp.lt.s32.totalorder %s17, 1
      %s238 = scalar_select %p237, %s17, 1
      %s239 = smul.addr %s238, 8
      %s240 = scalar_lea.vmem %s6, %s239
      %p241 = scmp.lt.s32.totalorder %s17, 1
      %s242 = scalar_select %p241, %s17, 1
      %s243 = smul.addr %s242, 3
      %s244 = smul.addr %s243, 4
      %s245 = scalar_lea.vmem %s0, %s244
      %p246 = scmp.lt.s32.totalorder %s17, 1
      %s247 = scalar_select %p246, %s17, 1
      %s248 = smul.addr %s247, 8
      %s249 = scalar_lea.vmem %s6, %s248
      %v250 = vld [vmem:[%s1] sm:$0xf]
      %v251 = vld [vmem:[%s3] sm:$0xff]
      %v252 = vld [vmem:[%s2] sm:$0xf]
      %v253 = vld [vmem:[%s4] sm:$0xff]
      %v254 = vld [vmem:[%s5] sm:$0x7]
      %v255 = vld [vmem:[%s245] sm:$0xf]
      %vm256 = vcmask 584704
      %257 = vst.msk [vmem:[#allocation2] sm:$0xf] %vm256, %v255
      %v258 = vld [vmem:[%s245] sm:$0xff]
      %v260 = vcombine.low %v258, %v258
      %261 = vrot.lane.b32.xlu0 %v260, 46
      %v262 = vpop.permute.xlu0 %261
      %263 = vrot.lane.b32.xlu0 %v258, 46
      %v264 = vpop.permute.xlu0 %263
      %vm265 = vcmask 375808
      %v266 = vsel %vm265, %v262, %v264
      %vm268 = vcmask 588804
      %269 = vst.msk [vmem:[#allocation2] sm:$0xf0] %vm268, %v266
      %v270 = vld [vmem:[%s245] sm:$0xf]
      %272 = vrot.lane.b32.xlu0 %v270, 127
      %v273 = vpop.permute.xlu0 %272
      %275 = vst.msk [vmem:[#allocation2 + $0x18] sm:$0xf] %vm256, %v273
      %v276 = vld [vmem:[%s245 + $0x4] sm:$0xf]
      %v278 = vcombine.low %v276, %v276
      %279 = vrot.lane.b32.xlu0 %v278, 92
      %v280 = vpop.permute.xlu0 %279
      %282 = vst.msk [vmem:[#allocation2 + $0x18] sm:$0xf0] %vm268, %v280
      %v283 = vld [vmem:[%s245 + $0x4] sm:$0xff]
      %v285 = vcombine.high %v283, %v283
      %286 = vrot.lane.b32.xlu0 %v283, 10
      %v287 = vpop.permute.xlu0 %286
      %288 = vrot.lane.b32.xlu0 %v285, 10
      %v289 = vpop.permute.xlu0 %288
      %vm290 = vcmask 80896
      %v291 = vsel %vm290, %v287, %v289
      %293 = vst.msk [vmem:[#allocation2 + $0x30] sm:$0xf] %vm256, %v291
      %v294 = vld [vmem:[%s245 + $0x4] sm:$0xf]
      %v296 = vcombine.low %v294, %v294
      %297 = vrot.lane.b32.xlu0 %v296, 91
      %v298 = vpop.permute.xlu0 %297
      %300 = vst.msk [vmem:[#allocation2 + $0x30] sm:$0xf0] %vm268, %v298
      %v301 = vld [vmem:[%s245] sm:$0xf]
      %303 = vrot.lane.b32.xlu0 %v301, 119
      %v304 = vpop.permute.xlu0 %303
      %306 = vst.msk [vmem:[#allocation2 + $0x48] sm:$0xf] %vm256, %v304
      %v307 = vld [vmem:[%s245] sm:$0xff]
      %v309 = vcombine.low %v307, %v307
      %310 = vrot.lane.b32.xlu0 %v309, 37
      %v311 = vpop.permute.xlu0 %310
      %312 = vrot.lane.b32.xlu0 %v307, 37
      %v313 = vpop.permute.xlu0 %312
      %vm314 = vcmask 302080
      %v315 = vsel %vm314, %v311, %v313
      %317 = vst.msk [vmem:[#allocation2 + $0x48] sm:$0xf0] %vm268, %v315
      %v318 = vld [vmem:[%s245] sm:$0xf]
      %320 = vrot.lane.b32.xlu0 %v318, 118
      %v321 = vpop.permute.xlu0 %320
      %323 = vst.msk [vmem:[#allocation2 + $0x60] sm:$0xf] %vm256, %v321
      %v324 = vld [vmem:[%s245] sm:$0xff]
      %v326 = vcombine.high %v324, %v324
      %327 = vrot.lane.b32.xlu0 %v324, 118
      %v328 = vpop.permute.xlu0 %327
      %329 = vrot.lane.b32.xlu0 %v326, 118
      %v330 = vpop.permute.xlu0 %329
      %vm331 = vcmask 965632
      %v332 = vsel %vm331, %v328, %v330
      %vm335 = vcmask 1044032
      %336 = vst.msk [vmem:[#allocation2] sm:$0xf] %vm335, %v332
      %vm337 = vcmask 125952
      %338 = vst.msk [vmem:[#allocation2 + $0x8] sm:$0xf] %vm337, %v330
      %v339 = vld [vmem:[%s245] sm:$0xf]
      %v341 = vcombine.low %v339, %v339
      %342 = vrot.lane.b32.xlu0 %v341, 71
      %v343 = vpop.permute.xlu0 %342
      %vm345 = vcmask 1048132
      %346 = vst.msk [vmem:[#allocation2] sm:$0xf0] %vm345, %v343
      %vm347 = vcmask 130052
      %348 = vst.msk [vmem:[#allocation2 + $0x8] sm:$0xf0] %vm347, %v343
      %v349 = vld [vmem:[%s245] sm:$0xff]
      %v351 = vcombine.high %v349, %v349
      %352 = vrot.lane.b32.xlu0 %v349, 117
      %v353 = vpop.permute.xlu0 %352
      %354 = vrot.lane.b32.xlu0 %v351, 117
      %v355 = vpop.permute.xlu0 %354
      %vm356 = vcmask 957440
      %v357 = vsel %vm356, %v353, %v355
      %360 = vst.msk [vmem:[#allocation2 + $0x18] sm:$0xf] %vm335, %v357
      %361 = vst.msk [vmem:[#allocation2 + $0x20] sm:$0xf] %vm337, %v355
      %v362 = vld [vmem:[%s245 + $0x4] sm:$0xff]
      %v364 = vcombine.low %v362, %v362
      %365 = vrot.lane.b32.xlu0 %v364, 82
      %v366 = vpop.permute.xlu0 %365
      %367 = vrot.lane.b32.xlu0 %v362, 82
      %v368 = vpop.permute.xlu0 %367
      %vm369 = vcmask 670720
      %v370 = vsel %vm369, %v366, %v368
      %373 = vst.msk [vmem:[#allocation2 + $0x18] sm:$0xf0] %vm345, %v370
      %374 = vst.msk [vmem:[#allocation2 + $0x20] sm:$0xf0] %vm347, %v368
      %v375 = vld [vmem:[%s245 + $0x4] sm:$0xf]
      %377 = vrot.lane.b32.xlu0 %v375, 35
      %v378 = vpop.permute.xlu0 %377
      %380 = vst.msk [vmem:[#allocation2 + $0x30] sm:$0xf] %vm335, %v378
      %381 = vst.msk [vmem:[#allocation2 + $0x38] sm:$0xf] %vm337, %v378
      %v382 = vld [vmem:[%s245 + $0x4] sm:$0xff]
      %v384 = vcombine.low %v382, %v382
      %385 = vrot.lane.b32.xlu0 %v384, 81
      %v386 = vpop.permute.xlu0 %385
      %387 = vrot.lane.b32.xlu0 %v382, 81
      %v388 = vpop.permute.xlu0 %387
      %vm389 = vcmask 662528
      %v390 = vsel %vm389, %v386, %v388
      %393 = vst.msk [vmem:[#allocation2 + $0x30] sm:$0xf0] %vm345, %v390
      %394 = vst.msk [vmem:[#allocation2 + $0x38] sm:$0xf0] %vm347, %v388
      %v395 = vld [vmem:[%s245] sm:$0xff]
      %v397 = vcombine.high %v395, %v395
      %398 = vrot.lane.b32.xlu0 %v395, 109
      %v399 = vpop.permute.xlu0 %398
      %400 = vrot.lane.b32.xlu0 %v397, 109
      %v401 = vpop.permute.xlu0 %400
      %vm402 = vcmask 891904
      %v403 = vsel %vm402, %v399, %v401
      %406 = vst.msk [vmem:[#allocation2 + $0x48] sm:$0xf] %vm335, %v403
      %407 = vst.msk [vmem:[#allocation2 + $0x50] sm:$0xf] %vm337, %v401
      %v408 = vld [vmem:[%s245] sm:$0xf]
      %v410 = vcombine.low %v408, %v408
      %411 = vrot.lane.b32.xlu0 %v410, 62
      %v412 = vpop.permute.xlu0 %411
      %414 = vst.msk [vmem:[#allocation2 + $0x48] sm:$0xf0] %vm345, %v412
      %415 = vst.msk [vmem:[#allocation2 + $0x50] sm:$0xf0] %vm347, %v412
      %v416 = vld [vmem:[%s245] sm:$0xff]
      %v418 = vcombine.high %v416, %v416
      %419 = vrot.lane.b32.xlu0 %v416, 108
      %v420 = vpop.permute.xlu0 %419
      %421 = vrot.lane.b32.xlu0 %v418, 108
      %v422 = vpop.permute.xlu0 %421
      %vm423 = vcmask 883712
      %v424 = vsel %vm423, %v420, %v422
      %427 = vst.msk [vmem:[#allocation2 + $0x60] sm:$0xf] %vm335, %v424
      %428 = vst.msk [vmem:[#allocation2 + $0x68] sm:$0xf] %vm337, %v422
      %v429 = vld [vmem:[%s245 + $0x4] sm:$0xf]
      %431 = vrot.lane.b32.xlu0 %v429, 108
      %v432 = vpop.permute.xlu0 %431
      %vm434 = vcmask 715904
      %435 = vst.msk [vmem:[#allocation2 + $0x8] sm:$0xf] %vm434, %v432
      %v436 = vld [vmem:[%s245 + $0x4] sm:$0xff]
      %v438 = vcombine.low %v436, %v436
      %439 = vrot.lane.b32.xlu0 %v438, 26
      %v440 = vpop.permute.xlu0 %439
      %441 = vrot.lane.b32.xlu0 %v436, 26
      %v442 = vpop.permute.xlu0 %441
      %vm443 = vcmask 211968
      %v444 = vsel %vm443, %v440, %v442
      %vm446 = vcmask 720004
      %447 = vst.msk [vmem:[#allocation2 + $0x8] sm:$0xf0] %vm446, %v444
      %v448 = vld [vmem:[%s245 + $0x4] sm:$0xf]
      %450 = vrot.lane.b32.xlu0 %v448, 107
      %v451 = vpop.permute.xlu0 %450
      %453 = vst.msk [vmem:[#allocation2 + $0x20] sm:$0xf] %vm434, %v451
      %v454 = vld [vmem:[%s245] sm:$0xf]
      %v456 = vcombine.low %v454, %v454
      %457 = vrot.lane.b32.xlu0 %v456, 7
      %v458 = vpop.permute.xlu0 %457
      %460 = vst.msk [vmem:[#allocation2 + $0x20] sm:$0xf0] %vm446, %v458
      %v461 = vld [vmem:[%s245] sm:$0xff]
      %v463 = vcombine.high %v461, %v461
      %464 = vrot.lane.b32.xlu0 %v461, 53
      %v465 = vpop.permute.xlu0 %464
      %466 = vrot.lane.b32.xlu0 %v463, 53
      %v467 = vpop.permute.xlu0 %466
      %vm468 = vcmask 433152
      %v469 = vsel %vm468, %v465, %v467
      %471 = vst.msk [vmem:[#allocation2 + $0x38] sm:$0xf] %vm434, %v469
      %v472 = vld [vmem:[%s245] sm:$0xf]
      %v474 = vcombine.low %v472, %v472
      %475 = vrot.lane.b32.xlu0 %v474, 6
      %v476 = vpop.permute.xlu0 %475
      %478 = vst.msk [vmem:[#allocation2 + $0x38] sm:$0xf0] %vm446, %v476
      %v479 = vld [vmem:[%s245 + $0x4] sm:$0xf]
      %481 = vrot.lane.b32.xlu0 %v479, 99
      %v482 = vpop.permute.xlu0 %481
      %484 = vst.msk [vmem:[#allocation2 + $0x50] sm:$0xf] %vm434, %v482
      %v485 = vld [vmem:[%s245 + $0x4] sm:$0xff]
      %v487 = vcombine.low %v485, %v485
      %488 = vrot.lane.b32.xlu0 %v487, 17
      %v489 = vpop.permute.xlu0 %488
      %490 = vrot.lane.b32.xlu0 %v485, 17
      %v491 = vpop.permute.xlu0 %490
      %vm492 = vcmask 138240
      %v493 = vsel %vm492, %v489, %v491
      %495 = vst.msk [vmem:[#allocation2 + $0x50] sm:$0xf0] %vm446, %v493
      %v496 = vld [vmem:[%s245 + $0x4] sm:$0xf]
      %498 = vrot.lane.b32.xlu0 %v496, 98
      %v499 = vpop.permute.xlu0 %498
      %501 = vst.msk [vmem:[#allocation2 + $0x68] sm:$0xf] %vm434, %v499
      %v502 = vld [vmem:[%s245 + $0x4] sm:$0xff]
      %v504 = vcombine.high %v502, %v502
      %505 = vrot.lane.b32.xlu0 %v502, 98
      %v506 = vpop.permute.xlu0 %505
      %507 = vrot.lane.b32.xlu0 %v504, 98
      %v508 = vpop.permute.xlu0 %507
      %vm509 = vcmask 801792
      %v510 = vsel %vm509, %v506, %v508
      %vm513 = vcmask 1044160
      %514 = vst.msk [vmem:[#allocation2 + $0x8] sm:$0xf] %vm513, %v510
      %vm515 = vcmask 257024
      %516 = vst.msk [vmem:[#allocation2 + $0x10] sm:$0xf] %vm515, %v508
      %v517 = vld [vmem:[%s245 + $0x4] sm:$0xf]
      %v519 = vcombine.low %v517, %v517
      %520 = vrot.lane.b32.xlu0 %v519, 51
      %v521 = vpop.permute.xlu0 %520
      %vm523 = vcmask 1048260
      %524 = vst.msk [vmem:[#allocation2 + $0x8] sm:$0xf0] %vm523, %v521
      %vm525 = vcmask 261124
      %526 = vst.msk [vmem:[#allocation2 + $0x10] sm:$0xf0] %vm525, %v521
      %v527 = vld [vmem:[%s245 + $0x4] sm:$0xff]
      %v529 = vcombine.high %v527, %v527
      %530 = vrot.lane.b32.xlu0 %v527, 97
      %v531 = vpop.permute.xlu0 %530
      %532 = vrot.lane.b32.xlu0 %v529, 97
      %v533 = vpop.permute.xlu0 %532
      %vm534 = vcmask 793600
      %v535 = vsel %vm534, %v531, %v533
      %538 = vst.msk [vmem:[#allocation2 + $0x20] sm:$0xf] %vm513, %v535
      %539 = vst.msk [vmem:[#allocation2 + $0x28] sm:$0xf] %vm515, %v533
      %v540 = vld [vmem:[%s245] sm:$0xff]
      %v542 = vcombine.low %v540, %v540
      %543 = vrot.lane.b32.xlu0 %v542, 125
      %v544 = vpop.permute.xlu0 %543
      %545 = vrot.lane.b32.xlu0 %v540, 125
      %v546 = vpop.permute.xlu0 %545
      %vm547 = vcmask 1022976
      %v548 = vsel %vm547, %v544, %v546
      %551 = vst.msk [vmem:[#allocation2 + $0x20] sm:$0xf0] %vm523, %v548
      %552 = vst.msk [vmem:[#allocation2 + $0x28] sm:$0xf0] %vm525, %v546
      %v553 = vld [vmem:[%s245] sm:$0xf]
      %555 = vrot.lane.b32.xlu0 %v553, 78
      %v556 = vpop.permute.xlu0 %555
      %558 = vst.msk [vmem:[#allocation2 + $0x38] sm:$0xf] %vm513, %v556
      %559 = vst.msk [vmem:[#allocation2 + $0x40] sm:$0xf] %vm515, %v556
      %v560 = vld [vmem:[%s245] sm:$0xff]
      %v562 = vcombine.low %v560, %v560
      %563 = vrot.lane.b32.xlu0 %v562, 124
      %v564 = vpop.permute.xlu0 %563
      %565 = vrot.lane.b32.xlu0 %v560, 124
      %v566 = vpop.permute.xlu0 %565
      %vm567 = vcmask 1014784
      %v568 = vsel %vm567, %v564, %v566
      %571 = vst.msk [vmem:[#allocation2 + $0x38] sm:$0xf0] %vm523, %v568
      %572 = vst.msk [vmem:[#allocation2 + $0x40] sm:$0xf0] %vm525, %v566
      %v573 = vld [vmem:[%s245 + $0x4] sm:$0xff]
      %v575 = vcombine.high %v573, %v573
      %576 = vrot.lane.b32.xlu0 %v573, 89
      %v577 = vpop.permute.xlu0 %576
      %578 = vrot.lane.b32.xlu0 %v575, 89
      %v579 = vpop.permute.xlu0 %578
      %vm580 = vcmask 728064
      %v581 = vsel %vm580, %v577, %v579
      %584 = vst.msk [vmem:[#allocation2 + $0x50] sm:$0xf] %vm513, %v581
      %585 = vst.msk [vmem:[#allocation2 + $0x58] sm:$0xf] %vm515, %v579
      %v586 = vld [vmem:[%s245 + $0x4] sm:$0xf]
      %v588 = vcombine.low %v586, %v586
      %589 = vrot.lane.b32.xlu0 %v588, 42
      %v590 = vpop.permute.xlu0 %589
      %592 = vst.msk [vmem:[#allocation2 + $0x50] sm:$0xf0] %vm523, %v590
      %593 = vst.msk [vmem:[#allocation2 + $0x58] sm:$0xf0] %vm525, %v590
      %v594 = vld [vmem:[%s245 + $0x8] sm:$0xf]
      %596 = vrot.lane.b32.xlu0 %v594, 88
      %v597 = vpop.permute.xlu0 %596
      %599 = vst.msk [vmem:[#allocation2 + $0x68] sm:$0xf] %vm513, %v597
      %600 = vst.msk [vmem:[#allocation2 + $0x70] sm:$0xf] %vm515, %v597
      %v601 = vld [vmem:[#allocation2] sm:$0xff]
      %v602 = vld [vmem:[#allocation2 + $0x8] sm:$0xff]
      %v603 = vld [vmem:[#allocation2 + $0x10] sm:$0xff]
      %v604 = vld [vmem:[#allocation2 + $0x18] sm:$0xff]
      %v605 = vld [vmem:[#allocation2 + $0x20] sm:$0xff]
      %v606 = vld [vmem:[#allocation2 + $0x28] sm:$0xff]
      %v607 = vld [vmem:[#allocation2 + $0x30] sm:$0xff]
      %v608 = vld [vmem:[#allocation2 + $0x38] sm:$0xff]
      %v609 = vld [vmem:[#allocation2 + $0x40] sm:$0xff]
      %v610 = vld [vmem:[#allocation2 + $0x48] sm:$0xff]
      %v611 = vld [vmem:[#allocation2 + $0x50] sm:$0xff]
      %v612 = vld [vmem:[#allocation2 + $0x58] sm:$0xff]
      %v613 = vld [vmem:[#allocation2 + $0x60] sm:$0xf]
      %v614 = vld [vmem:[#allocation2 + $0x68] sm:$0xf]
      %v615 = vld [vmem:[#allocation2 + $0x70] sm:$0xf]
      %617 = vset.pattern.permute.xlu0 0
      %618 = vperm.xlu0 %617, %v252
      %v619 = vpop.permute.xlu0 %618
      %vm621 = vcmask 293888
      %v623 = vsel %vm621, %v250, 0
      %vm625 = vcmask 1043456
      %v627 = vsel %vm625, %v613, 0
      %v630 = vsel %vm625, %v614, 0
      %v633 = vsel %vm625, %v615, 0
      %635 = vmatprep.subr.mxu0 0.0
      %636 = vmatpush1.msra.mxu0 0.0
      %637 = vmatprep.subr.mxu0 0.0
      %638 = vmatpush1.msra.mxu0 0.0
      %639 = vmatprep.subr.mxu0 0.0
      %640 = vmatpush1.msra.mxu0 0.0
      %641 = vmatprep.subr.mxu0 0.0
      %642 = vmatpush1.msra.mxu0 0.0
      %643 = vmatprep.subr.mxu0 0.0
      %644 = vmatpush1.msra.mxu0 0.0
      %645 = vmatprep.subr.mxu0 0.0
      %646 = vmatpush1.msra.mxu0 0.0
      %647 = vmatprep.subr.mxu0 0.0
      %648 = vmatpush1.msra.mxu0 0.0
      %649 = vmatprep.subr.mxu0 0.0
      %650 = vmatpush1.msra.mxu0 0.0
      %651 = vmatprep.subr.mxu0 0.0
      %652 = vmatpush1.msra.mxu0 0.0
      %653 = vmatprep.subr.mxu0 0.0
      %654 = vmatpush1.msra.mxu0 0.0
      %655 = vmatprep.subr.mxu0 0.0
      %656 = vmatpush1.msra.mxu0 0.0
      %657 = vmatprep.subr.mxu0 %v630
      %658 = vmatpush1.msra.mxu0 %v627
      %659 = vmatprep.subr.mxu0 %v611
      %660 = vmatpush1.msra.mxu0 %v610
      %661 = vmatprep.subr.mxu0 %v608
      %662 = vmatpush1.msra.mxu0 %v607
      %663 = vmatprep.subr.mxu0 %v605
      %664 = vmatpush1.msra.mxu0 %v604
      %665 = vmatprep.subr.mxu0 %v602
      %666 = vmatpush1.msra.mxu0 %v601
      %667 = vmatprep.subr.mxu0 0.0
      %668 = vmatpush2.msra.mxu0 0.0
      %669 = vmatprep.subr.mxu0 0.0
      %670 = vmatpush2.msra.mxu0 0.0
      %671 = vmatprep.subr.mxu0 0.0
      %672 = vmatpush2.msra.mxu0 0.0
      %673 = vmatprep.subr.mxu0 0.0
      %674 = vmatpush2.msra.mxu0 0.0
      %675 = vmatprep.subr.mxu0 0.0
      %676 = vmatpush2.msra.mxu0 0.0
      %677 = vmatprep.subr.mxu0 0.0
      %678 = vmatpush2.msra.mxu0 0.0
      %679 = vmatprep.subr.mxu0 0.0
      %680 = vmatpush2.msra.mxu0 0.0
      %681 = vmatprep.subr.mxu0 0.0
      %682 = vmatpush2.msra.mxu0 0.0
      %683 = vmatprep.subr.mxu0 0.0
      %684 = vmatpush2.msra.mxu0 0.0
      %685 = vmatprep.subr.mxu0 0.0
      %686 = vmatpush2.msra.mxu0 0.0
      %687 = vmatprep.subr.mxu0 0.0
      %688 = vmatpush2.msra.mxu0 0.0
      %689 = vmatprep.subr.mxu0 0.0
      %690 = vmatpush2.msra.mxu0 0.0
      %691 = vmatprep.subr.mxu0 0.0
      %692 = vmatpush2.msra.mxu0 0.0
      %693 = vmatprep.subr.mxu0 0.0
      %694 = vmatpush2.msra.mxu0 0.0
      %695 = vmatprep.subr.mxu0 0.0
      %696 = vmatpush2.msra.mxu0 0.0
      %697 = vmatprep.subr.mxu0 0.0
      %698 = vmatpush2.msra.mxu0 0.0
      %699 = vmatprep.mubr.f32.mxu0 0.0
      %700 = vmatmul.mubr.f32.gmra.mxu0 %v623
      %v701 = vpop.f32.mrf.mxu0
      %v702 = vadd.f32 %v619, %v701
      %v703 = vpop.f32.mrf.mxu0
      %v704 = vadd.f32 %v619, %v703
      %705 = vdwg.mxu0
      %706 = vmatprep.subr.mxu0 0.0
      %707 = vmatpush1.msra.mxu0 0.0
      %708 = vmatprep.subr.mxu0 0.0
      %709 = vmatpush1.msra.mxu0 0.0
      %710 = vmatprep.subr.mxu0 0.0
      %711 = vmatpush1.msra.mxu0 0.0
      %712 = vmatprep.subr.mxu0 0.0
      %713 = vmatpush1.msra.mxu0 0.0
      %714 = vmatprep.subr.mxu0 0.0
      %715 = vmatpush1.msra.mxu0 0.0
      %716 = vmatprep.subr.mxu0 0.0
      %717 = vmatpush1.msra.mxu0 0.0
      %718 = vmatprep.subr.mxu0 0.0
      %719 = vmatpush1.msra.mxu0 0.0
      %720 = vmatprep.subr.mxu0 0.0
      %721 = vmatpush1.msra.mxu0 0.0
      %722 = vmatprep.subr.mxu0 0.0
      %723 = vmatpush1.msra.mxu0 0.0
      %724 = vmatprep.subr.mxu0 0.0
      %725 = vmatpush1.msra.mxu0 0.0
      %726 = vmatprep.subr.mxu0 0.0
      %727 = vmatpush1.msra.mxu0 0.0
      %728 = vmatprep.subr.mxu0 0.0
      %729 = vmatpush1.msra.mxu0 %v633
      %730 = vmatprep.subr.mxu0 0.0
      %731 = vmatpush1.msra.mxu0 %v612
      %732 = vmatprep.subr.mxu0 0.0
      %733 = vmatpush1.msra.mxu0 %v609
      %734 = vmatprep.subr.mxu0 0.0
      %735 = vmatpush1.msra.mxu0 %v606
      %736 = vmatprep.subr.mxu0 0.0
      %737 = vmatpush1.msra.mxu0 %v603
      %738 = vmatprep.subr.mxu0 0.0
      %739 = vmatpush2.msra.mxu0 0.0
      %740 = vmatprep.subr.mxu0 0.0
      %741 = vmatpush2.msra.mxu0 0.0
      %742 = vmatprep.subr.mxu0 0.0
      %743 = vmatpush2.msra.mxu0 0.0
      %744 = vmatprep.subr.mxu0 0.0
      %745 = vmatpush2.msra.mxu0 0.0
      %746 = vmatprep.subr.mxu0 0.0
      %747 = vmatpush2.msra.mxu0 0.0
      %748 = vmatprep.subr.mxu0 0.0
      %749 = vmatpush2.msra.mxu0 0.0
      %750 = vmatprep.subr.mxu0 0.0
      %751 = vmatpush2.msra.mxu0 0.0
      %752 = vmatprep.subr.mxu0 0.0
      %753 = vmatpush2.msra.mxu0 0.0
      %754 = vmatprep.subr.mxu0 0.0
      %755 = vmatpush2.msra.mxu0 0.0
      %756 = vmatprep.subr.mxu0 0.0
      %757 = vmatpush2.msra.mxu0 0.0
      %758 = vmatprep.subr.mxu0 0.0
      %759 = vmatpush2.msra.mxu0 0.0
      %760 = vmatprep.subr.mxu0 0.0
      %761 = vmatpush2.msra.mxu0 0.0
      %762 = vmatprep.subr.mxu0 0.0
      %763 = vmatpush2.msra.mxu0 0.0
      %764 = vmatprep.subr.mxu0 0.0
      %765 = vmatpush2.msra.mxu0 0.0
      %766 = vmatprep.subr.mxu0 0.0
      %767 = vmatpush2.msra.mxu0 0.0
      %768 = vmatprep.subr.mxu0 0.0
      %769 = vmatpush2.msra.mxu0 0.0
      %770 = vmatprep.mubr.f32.mxu0 0.0
      %771 = vmatmul.mubr.f32.gmra.mxu0 %v623
      %v772 = vpop.f32.mrf.mxu0
      %v773 = vadd.f32 %v619, %v772
      %v774 = vpop.f32.mrf.mxu0
      %775 = vdwg.mxu0
      %vm776 = vcmp.gt.f32.partialorder %v702, 0.0
      %vm777 = vcmp.gt.f32.partialorder %v704, 0.0
      %vm778 = vcmp.gt.f32.partialorder %v773, 0.0
      %v779 = vmul.f32 %v702, 0.2
      %v780 = vmul.f32 %v704, 0.2
      %v781 = vmul.f32 %v773, 0.2
      %v782 = vsel %vm776, %v702, %v779
      %v783 = vsel %vm777, %v704, %v780
      %v784 = vsel %vm778, %v773, %v781
      %v786 = vlaneseq
      %v787 = vshrl.u32 %v786, 7
      %v788 = vsub.s32 0, %v787
      %v789 = vrot.slane %v254, %v788
      %v790 = vlaneseq
      %v791 = vshrl.u32 %v790, 7
      %v792 = vsub.s32 1, %v791
      %v793 = vrot.slane %v254, %v792
      %v794 = vlaneseq
      %v795 = vshrl.u32 %v794, 7
      %v796 = vsub.s32 2, %v795
      %v797 = vrot.slane %v254, %v796
      %v801 = vmul.f32 %v782, %v789
      %v802 = vmul.f32 %v783, %v793
      %v803 = vmul.f32 %v784, %v797
      %vm804 = vcmask 76800
      %805 = vst.msk [vmem:[#allocation3] sm:$0xf] %vm804, 0.0
      %v808 = vcombine.low %v802, %v803
      %809 = vrot.lane.b32.xlu0 %v808, 50
      %v810 = vpop.permute.xlu0 %809
      %v811 = vrot.slane %v810, 4
      %vm812 = vcmask 408576
      %v813 = vsel %vm812, %v810, %v811
      %vm815 = vcmask 666704
      %816 = vst.msk [vmem:[#allocation3] sm:$0xf] %vm815, %v813
      %vm817 = vcmask 741008
      %818 = vst.msk [vmem:[#allocation3] sm:$0xf] %vm817, 0.0
      %819 = vrot.lane.b32.xlu0 %v802, 75
      %v820 = vpop.permute.xlu0 %819
      %v821 = vrot.slane %v820, 4
      %vm822 = vcmask 613376
      %v823 = vsel %vm822, %v821, %v820
      %vm825 = vcmask 1044184
      %vm826 = vcmask 285700
      %vm827 = vmor %vm826, %vm825
      %828 = vst.msk [vmem:[#allocation3] sm:$0xff] %vm827, %v823
      %vm829 = vcmask 290072
      %830 = vst.msk [vmem:[#allocation3 + $0x4] sm:$0xf] %vm829, 0.0
      %vm831 = vcmask 298272
      %832 = vst.msk [vmem:[#allocation3 + $0x4] sm:$0xf] %vm831, 0.0
      %v834 = vcombine.low %v801, %v802
      %835 = vrot.lane.b32.xlu0 %v834, 93
      %v836 = vpop.permute.xlu0 %835
      %v837 = vrot.slane %v836, 4
      %vm838 = vcmask 760832
      %v839 = vsel %vm838, %v836, %v837
      %vm841 = vcmask 888104
      %842 = vst.msk [vmem:[#allocation3 + $0x4] sm:$0xf] %vm841, %v839
      %vm843 = vcmask 962408
      %844 = vst.msk [vmem:[#allocation3 + $0x4] sm:$0xf] %vm843, 0.0
      %845 = vrot.lane.b32.xlu0 %v801, 118
      %v846 = vpop.permute.xlu0 %845
      %v847 = vrot.slane %v846, 4
      %v848 = vsel %vm331, %v847, %v846
      %vm850 = vcmask 1044400
      %vm851 = vcmask 506884
      %vm852 = vmor %vm851, %vm850
      %853 = vst.msk [vmem:[#allocation3 + $0x4] sm:$0xff] %vm852, %v848
      %vm854 = vcmask 585200
      %855 = vst.msk [vmem:[#allocation3 + $0x8] sm:$0xf] %vm854, 0.0
      %v856 = vld [vmem:[#allocation3] sm:$0xf]
      %857 = vst.msk [vmem:[#allocation2] sm:$0xf] %vm256, %v856
      %v858 = vld [vmem:[#allocation3] sm:$0xff]
      %v860 = vcombine.low %v858, %v858
      %861 = vrot.lane.b32.xlu0 %v860, 46
      %v862 = vpop.permute.xlu0 %861
      %863 = vrot.lane.b32.xlu0 %v858, 46
      %v864 = vpop.permute.xlu0 %863
      %v865 = vsel %vm265, %v862, %v864
      %867 = vst.msk [vmem:[#allocation2] sm:$0xf0] %vm268, %v865
      %v868 = vld [vmem:[#allocation3] sm:$0xf]
      %870 = vrot.lane.b32.xlu0 %v868, 127
      %v871 = vpop.permute.xlu0 %870
      %873 = vst.msk [vmem:[#allocation2 + $0x18] sm:$0xf] %vm256, %v871
      %v874 = vld [vmem:[#allocation3 + $0x4] sm:$0xf]
      %v876 = vcombine.low %v874, %v874
      %877 = vrot.lane.b32.xlu0 %v876, 92
      %v878 = vpop.permute.xlu0 %877
      %880 = vst.msk [vmem:[#allocation2 + $0x18] sm:$0xf0] %vm268, %v878
      %v881 = vld [vmem:[#allocation3 + $0x4] sm:$0xff]
      %v883 = vcombine.high %v881, %v881
      %884 = vrot.lane.b32.xlu0 %v881, 10
      %v885 = vpop.permute.xlu0 %884
      %886 = vrot.lane.b32.xlu0 %v883, 10
      %v887 = vpop.permute.xlu0 %886
      %v888 = vsel %vm290, %v885, %v887
      %890 = vst.msk [vmem:[#allocation2 + $0x30] sm:$0xf] %vm256, %v888
      %v891 = vld [vmem:[#allocation3 + $0x4] sm:$0xf]
      %v893 = vcombine.low %v891, %v891
      %894 = vrot.lane.b32.xlu0 %v893, 91
      %v895 = vpop.permute.xlu0 %894
      %897 = vst.msk [vmem:[#allocation2 + $0x30] sm:$0xf0] %vm268, %v895
      %v898 = vld [vmem:[#allocation3] sm:$0xf]
      %900 = vrot.lane.b32.xlu0 %v898, 119
      %v901 = vpop.permute.xlu0 %900
      %903 = vst.msk [vmem:[#allocation2 + $0x48] sm:$0xf] %vm256, %v901
      %v904 = vld [vmem:[#allocation3] sm:$0xff]
      %v906 = vcombine.low %v904, %v904
      %907 = vrot.lane.b32.xlu0 %v906, 37
      %v908 = vpop.permute.xlu0 %907
      %909 = vrot.lane.b32.xlu0 %v904, 37
      %v910 = vpop.permute.xlu0 %909
      %v911 = vsel %vm314, %v908, %v910
      %913 = vst.msk [vmem:[#allocation2 + $0x48] sm:$0xf0] %vm268, %v911
      %v914 = vld [vmem:[#allocation3] sm:$0xf]
      %916 = vrot.lane.b32.xlu0 %v914, 118
      %v917 = vpop.permute.xlu0 %916
      %919 = vst.msk [vmem:[#allocation2 + $0x60] sm:$0xf] %vm256, %v917
      %v920 = vld [vmem:[#allocation3] sm:$0xff]
      %v922 = vcombine.high %v920, %v920
      %923 = vrot.lane.b32.xlu0 %v920, 118
      %v924 = vpop.permute.xlu0 %923
      %925 = vrot.lane.b32.xlu0 %v922, 118
      %v926 = vpop.permute.xlu0 %925
      %v927 = vsel %vm331, %v924, %v926
      %930 = vst.msk [vmem:[#allocation2] sm:$0xf] %vm335, %v927
      %931 = vst.msk [vmem:[#allocation2 + $0x8] sm:$0xf] %vm337, %v926
      %v932 = vld [vmem:[#allocation3] sm:$0xf]
      %v934 = vcombine.low %v932, %v932
      %935 = vrot.lane.b32.xlu0 %v934, 71
      %v936 = vpop.permute.xlu0 %935
      %938 = vst.msk [vmem:[#allocation2] sm:$0xf0] %vm345, %v936
      %939 = vst.msk [vmem:[#allocation2 + $0x8] sm:$0xf0] %vm347, %v936
      %v940 = vld [vmem:[#allocation3] sm:$0xff]
      %v942 = vcombine.high %v940, %v940
      %943 = vrot.lane.b32.xlu0 %v940, 117
      %v944 = vpop.permute.xlu0 %943
      %945 = vrot.lane.b32.xlu0 %v942, 117
      %v946 = vpop.permute.xlu0 %945
      %v947 = vsel %vm356, %v944, %v946
      %950 = vst.msk [vmem:[#allocation2 + $0x18] sm:$0xf] %vm335, %v947
      %951 = vst.msk [vmem:[#allocation2 + $0x20] sm:$0xf] %vm337, %v946
      %v952 = vld [vmem:[#allocation3 + $0x4] sm:$0xff]
      %v954 = vcombine.low %v952, %v952
      %955 = vrot.lane.b32.xlu0 %v954, 82
      %v956 = vpop.permute.xlu0 %955
      %957 = vrot.lane.b32.xlu0 %v952, 82
      %v958 = vpop.permute.xlu0 %957
      %v959 = vsel %vm369, %v956, %v958
      %962 = vst.msk [vmem:[#allocation2 + $0x18] sm:$0xf0] %vm345, %v959
      %963 = vst.msk [vmem:[#allocation2 + $0x20] sm:$0xf0] %vm347, %v958
      %v964 = vld [vmem:[#allocation3 + $0x4] sm:$0xf]
      %966 = vrot.lane.b32.xlu0 %v964, 35
      %v967 = vpop.permute.xlu0 %966
      %969 = vst.msk [vmem:[#allocation2 + $0x30] sm:$0xf] %vm335, %v967
      %970 = vst.msk [vmem:[#allocation2 + $0x38] sm:$0xf] %vm337, %v967
      %v971 = vld [vmem:[#allocation3 + $0x4] sm:$0xff]
      %v973 = vcombine.low %v971, %v971
      %974 = vrot.lane.b32.xlu0 %v973, 81
      %v975 = vpop.permute.xlu0 %974
      %976 = vrot.lane.b32.xlu0 %v971, 81
      %v977 = vpop.permute.xlu0 %976
      %v978 = vsel %vm389, %v975, %v977
      %981 = vst.msk [vmem:[#allocation2 + $0x30] sm:$0xf0] %vm345, %v978
      %982 = vst.msk [vmem:[#allocation2 + $0x38] sm:$0xf0] %vm347, %v977
      %v983 = vld [vmem:[#allocation3] sm:$0xff]
      %v985 = vcombine.high %v983, %v983
      %986 = vrot.lane.b32.xlu0 %v983, 109
      %v987 = vpop.permute.xlu0 %986
      %988 = vrot.lane.b32.xlu0 %v985, 109
      %v989 = vpop.permute.xlu0 %988
      %v990 = vsel %vm402, %v987, %v989
      %993 = vst.msk [vmem:[#allocation2 + $0x48] sm:$0xf] %vm335, %v990
      %994 = vst.msk [vmem:[#allocation2 + $0x50] sm:$0xf] %vm337, %v989
      %v995 = vld [vmem:[#allocation3] sm:$0xf]
      %v997 = vcombine.low %v995, %v995
      %998 = vrot.lane.b32.xlu0 %v997, 62
      %v999 = vpop.permute.xlu0 %998
      %1001 = vst.msk [vmem:[#allocation2 + $0x48] sm:$0xf0] %vm345, %v999
      %1002 = vst.msk [vmem:[#allocation2 + $0x50] sm:$0xf0] %vm347, %v999
      %v1003 = vld [vmem:[#allocation3] sm:$0xff]
      %v1005 = vcombine.high %v1003, %v1003
      %1006 = vrot.lane.b32.xlu0 %v1003, 108
      %v1007 = vpop.permute.xlu0 %1006
      %1008 = vrot.lane.b32.xlu0 %v1005, 108
      %v1009 = vpop.permute.xlu0 %1008
      %v1010 = vsel %vm423, %v1007, %v1009
      %1013 = vst.msk [vmem:[#allocation2 + $0x60] sm:$0xf] %vm335, %v1010
      %1014 = vst.msk [vmem:[#allocation2 + $0x68] sm:$0xf] %vm337, %v1009
      %v1015 = vld [vmem:[#allocation3 + $0x4] sm:$0xf]
      %1017 = vrot.lane.b32.xlu0 %v1015, 108
      %v1018 = vpop.permute.xlu0 %1017
      %1020 = vst.msk [vmem:[#allocation2 + $0x8] sm:$0xf] %vm434, %v1018
      %v1021 = vld [vmem:[#allocation3 + $0x4] sm:$0xff]
      %v1023 = vcombine.low %v1021, %v1021
      %1024 = vrot.lane.b32.xlu0 %v1023, 26
      %v1025 = vpop.permute.xlu0 %1024
      %1026 = vrot.lane.b32.xlu0 %v1021, 26
      %v1027 = vpop.permute.xlu0 %1026
      %v1028 = vsel %vm443, %v1025, %v1027
      %1030 = vst.msk [vmem:[#allocation2 + $0x8] sm:$0xf0] %vm446, %v1028
      %v1031 = vld [vmem:[#allocation3 + $0x4] sm:$0xf]
      %1033 = vrot.lane.b32.xlu0 %v1031, 107
      %v1034 = vpop.permute.xlu0 %1033
      %1036 = vst.msk [vmem:[#allocation2 + $0x20] sm:$0xf] %vm434, %v1034
      %v1037 = vld [vmem:[#allocation3] sm:$0xf]
      %v1039 = vcombine.low %v1037, %v1037
      %1040 = vrot.lane.b32.xlu0 %v1039, 7
      %v1041 = vpop.permute.xlu0 %1040
      %1043 = vst.msk [vmem:[#allocation2 + $0x20] sm:$0xf0] %vm446, %v1041
      %v1044 = vld [vmem:[#allocation3] sm:$0xff]
      %v1046 = vcombine.high %v1044, %v1044
      %1047 = vrot.lane.b32.xlu0 %v1044, 53
      %v1048 = vpop.permute.xlu0 %1047
      %1049 = vrot.lane.b32.xlu0 %v1046, 53
      %v1050 = vpop.permute.xlu0 %1049
      %v1051 = vsel %vm468, %v1048, %v1050
      %1053 = vst.msk [vmem:[#allocation2 + $0x38] sm:$0xf] %vm434, %v1051
      %v1054 = vld [vmem:[#allocation3] sm:$0xf]
      %v1056 = vcombine.low %v1054, %v1054
      %1057 = vrot.lane.b32.xlu0 %v1056, 6
      %v1058 = vpop.permute.xlu0 %1057
      %1060 = vst.msk [vmem:[#allocation2 + $0x38] sm:$0xf0] %vm446, %v1058
      %v1061 = vld [vmem:[#allocation3 + $0x4] sm:$0xf]
      %1063 = vrot.lane.b32.xlu0 %v1061, 99
      %v1064 = vpop.permute.xlu0 %1063
      %1066 = vst.msk [vmem:[#allocation2 + $0x50] sm:$0xf] %vm434, %v1064
      %v1067 = vld [vmem:[#allocation3 + $0x4] sm:$0xff]
      %v1069 = vcombine.low %v1067, %v1067
      %1070 = vrot.lane.b32.xlu0 %v1069, 17
      %v1071 = vpop.permute.xlu0 %1070
      %1072 = vrot.lane.b32.xlu0 %v1067, 17
      %v1073 = vpop.permute.xlu0 %1072
      %v1074 = vsel %vm492, %v1071, %v1073
      %1076 = vst.msk [vmem:[#allocation2 + $0x50] sm:$0xf0] %vm446, %v1074
      %v1077 = vld [vmem:[#allocation3 + $0x4] sm:$0xf]
      %1079 = vrot.lane.b32.xlu0 %v1077, 98
      %v1080 = vpop.permute.xlu0 %1079
      %1082 = vst.msk [vmem:[#allocation2 + $0x68] sm:$0xf] %vm434, %v1080
      %v1083 = vld [vmem:[#allocation3 + $0x4] sm:$0xff]
      %v1085 = vcombine.high %v1083, %v1083
      %1086 = vrot.lane.b32.xlu0 %v1083, 98
      %v1087 = vpop.permute.xlu0 %1086
      %1088 = vrot.lane.b32.xlu0 %v1085, 98
      %v1089 = vpop.permute.xlu0 %1088
      %v1090 = vsel %vm509, %v1087, %v1089
      %1093 = vst.msk [vmem:[#allocation2 + $0x8] sm:$0xf] %vm513, %v1090
      %1094 = vst.msk [vmem:[#allocation2 + $0x10] sm:$0xf] %vm515, %v1089
      %v1095 = vld [vmem:[#allocation3 + $0x4] sm:$0xf]
      %v1097 = vcombine.low %v1095, %v1095
      %1098 = vrot.lane.b32.xlu0 %v1097, 51
      %v1099 = vpop.permute.xlu0 %1098
      %1101 = vst.msk [vmem:[#allocation2 + $0x8] sm:$0xf0] %vm523, %v1099
      %1102 = vst.msk [vmem:[#allocation2 + $0x10] sm:$0xf0] %vm525, %v1099
      %v1103 = vld [vmem:[#allocation3 + $0x4] sm:$0xff]
      %v1105 = vcombine.high %v1103, %v1103
      %1106 = vrot.lane.b32.xlu0 %v1103, 97
      %v1107 = vpop.permute.xlu0 %1106
      %1108 = vrot.lane.b32.xlu0 %v1105, 97
      %v1109 = vpop.permute.xlu0 %1108
      %v1110 = vsel %vm534, %v1107, %v1109
      %1113 = vst.msk [vmem:[#allocation2 + $0x20] sm:$0xf] %vm513, %v1110
      %1114 = vst.msk [vmem:[#allocation2 + $0x28] sm:$0xf] %vm515, %v1109
      %v1115 = vld [vmem:[#allocation3] sm:$0xff]
      %v1117 = vcombine.low %v1115, %v1115
      %1118 = vrot.lane.b32.xlu0 %v1117, 125
      %v1119 = vpop.permute.xlu0 %1118
      %1120 = vrot.lane.b32.xlu0 %v1115, 125
      %v1121 = vpop.permute.xlu0 %1120
      %v1122 = vsel %vm547, %v1119, %v1121
      %1125 = vst.msk [vmem:[#allocation2 + $0x20] sm:$0xf0] %vm523, %v1122
      %1126 = vst.msk [vmem:[#allocation2 + $0x28] sm:$0xf0] %vm525, %v1121
      %v1127 = vld [vmem:[#allocation3] sm:$0xf]
      %1129 = vrot.lane.b32.xlu0 %v1127, 78
      %v1130 = vpop.permute.xlu0 %1129
      %1132 = vst.msk [vmem:[#allocation2 + $0x38] sm:$0xf] %vm513, %v1130
      %1133 = vst.msk [vmem:[#allocation2 + $0x40] sm:$0xf] %vm515, %v1130
      %v1134 = vld [vmem:[#allocation3] sm:$0xff]
      %v1136 = vcombine.low %v1134, %v1134
      %1137 = vrot.lane.b32.xlu0 %v1136, 124
      %v1138 = vpop.permute.xlu0 %1137
      %1139 = vrot.lane.b32.xlu0 %v1134, 124
      %v1140 = vpop.permute.xlu0 %1139
      %v1141 = vsel %vm567, %v1138, %v1140
      %1144 = vst.msk [vmem:[#allocation2 + $0x38] sm:$0xf0] %vm523, %v1141
      %1145 = vst.msk [vmem:[#allocation2 + $0x40] sm:$0xf0] %vm525, %v1140
      %v1146 = vld [vmem:[#allocation3 + $0x4] sm:$0xff]
      %v1148 = vcombine.high %v1146, %v1146
      %1149 = vrot.lane.b32.xlu0 %v1146, 89
      %v1150 = vpop.permute.xlu0 %1149
      %1151 = vrot.lane.b32.xlu0 %v1148, 89
      %v1152 = vpop.permute.xlu0 %1151
      %v1153 = vsel %vm580, %v1150, %v1152
      %1156 = vst.msk [vmem:[#allocation2 + $0x50] sm:$0xf] %vm513, %v1153
      %1157 = vst.msk [vmem:[#allocation2 + $0x58] sm:$0xf] %vm515, %v1152
      %v1158 = vld [vmem:[#allocation3 + $0x4] sm:$0xf]
      %v1160 = vcombine.low %v1158, %v1158
      %1161 = vrot.lane.b32.xlu0 %v1160, 42
      %v1162 = vpop.permute.xlu0 %1161
      %1164 = vst.msk [vmem:[#allocation2 + $0x50] sm:$0xf0] %vm523, %v1162
      %1165 = vst.msk [vmem:[#allocation2 + $0x58] sm:$0xf0] %vm525, %v1162
      %v1166 = vld [vmem:[#allocation3 + $0x8] sm:$0xf]
      %1168 = vrot.lane.b32.xlu0 %v1166, 88
      %v1169 = vpop.permute.xlu0 %1168
      %1171 = vst.msk [vmem:[#allocation2 + $0x68] sm:$0xf] %vm513, %v1169
      %1172 = vst.msk [vmem:[#allocation2 + $0x70] sm:$0xf] %vm515, %v1169
      %v1173 = vld [vmem:[#allocation2] sm:$0xff]
      %v1174 = vld [vmem:[#allocation2 + $0x8] sm:$0xff]
      %v1175 = vld [vmem:[#allocation2 + $0x10] sm:$0xff]
      %v1176 = vld [vmem:[#allocation2 + $0x18] sm:$0xff]
      %v1177 = vld [vmem:[#allocation2 + $0x20] sm:$0xff]
      %v1178 = vld [vmem:[#allocation2 + $0x28] sm:$0xff]
      %v1179 = vld [vmem:[#allocation2 + $0x30] sm:$0xff]
      %v1180 = vld [vmem:[#allocation2 + $0x38] sm:$0xff]
      %v1181 = vld [vmem:[#allocation2 + $0x40] sm:$0xff]
      %v1182 = vld [vmem:[#allocation2 + $0x48] sm:$0xff]
      %v1183 = vld [vmem:[#allocation2 + $0x50] sm:$0xff]
      %v1184 = vld [vmem:[#allocation2 + $0x58] sm:$0xff]
      %v1185 = vld [vmem:[#allocation2 + $0x60] sm:$0xf]
      %v1186 = vld [vmem:[#allocation2 + $0x68] sm:$0xf]
      %v1187 = vld [vmem:[#allocation2 + $0x70] sm:$0xf]
      %1189 = vset.pattern.permute.xlu0 0
      %1190 = vperm.xlu0 %1189, %v253
      %v1191 = vpop.permute.xlu0 %1190
      %v1194 = vsel %vm621, %v251, 0
      %v1197 = vsel %vm625, %v1185, 0
      %v1200 = vsel %vm625, %v1186, 0
      %v1203 = vsel %vm625, %v1187, 0
      %1205 = vmatprep.subr.mxu0 0.0
      %1206 = vmatpush1.msra.mxu0 0.0
      %1207 = vmatprep.subr.mxu0 0.0
      %1208 = vmatpush1.msra.mxu0 0.0
      %1209 = vmatprep.subr.mxu0 0.0
      %1210 = vmatpush1.msra.mxu0 0.0
      %1211 = vmatprep.subr.mxu0 0.0
      %1212 = vmatpush1.msra.mxu0 0.0
      %1213 = vmatprep.subr.mxu0 0.0
      %1214 = vmatpush1.msra.mxu0 0.0
      %1215 = vmatprep.subr.mxu0 0.0
      %1216 = vmatpush1.msra.mxu0 0.0
      %1217 = vmatprep.subr.mxu0 0.0
      %1218 = vmatpush1.msra.mxu0 0.0
      %1219 = vmatprep.subr.mxu0 0.0
      %1220 = vmatpush1.msra.mxu0 0.0
      %1221 = vmatprep.subr.mxu0 0.0
      %1222 = vmatpush1.msra.mxu0 0.0
      %1223 = vmatprep.subr.mxu0 0.0
      %1224 = vmatpush1.msra.mxu0 0.0
      %1225 = vmatprep.subr.mxu0 0.0
      %1226 = vmatpush1.msra.mxu0 0.0
      %1227 = vmatprep.subr.mxu0 %v1200
      %1228 = vmatpush1.msra.mxu0 %v1197
      %1229 = vmatprep.subr.mxu0 %v1183
      %1230 = vmatpush1.msra.mxu0 %v1182
      %1231 = vmatprep.subr.mxu0 %v1180
      %1232 = vmatpush1.msra.mxu0 %v1179
      %1233 = vmatprep.subr.mxu0 %v1177
      %1234 = vmatpush1.msra.mxu0 %v1176
      %1235 = vmatprep.subr.mxu0 %v1174
      %1236 = vmatpush1.msra.mxu0 %v1173
      %1237 = vmatprep.subr.mxu0 0.0
      %1238 = vmatpush2.msra.mxu0 0.0
      %1239 = vmatprep.subr.mxu0 0.0
      %1240 = vmatpush2.msra.mxu0 0.0
      %1241 = vmatprep.subr.mxu0 0.0
      %1242 = vmatpush2.msra.mxu0 0.0
      %1243 = vmatprep.subr.mxu0 0.0
      %1244 = vmatpush2.msra.mxu0 0.0
      %1245 = vmatprep.subr.mxu0 0.0
      %1246 = vmatpush2.msra.mxu0 0.0
      %1247 = vmatprep.subr.mxu0 0.0
      %1248 = vmatpush2.msra.mxu0 0.0
      %1249 = vmatprep.subr.mxu0 0.0
      %1250 = vmatpush2.msra.mxu0 0.0
      %1251 = vmatprep.subr.mxu0 0.0
      %1252 = vmatpush2.msra.mxu0 0.0
      %1253 = vmatprep.subr.mxu0 0.0
      %1254 = vmatpush2.msra.mxu0 0.0
      %1255 = vmatprep.subr.mxu0 0.0
      %1256 = vmatpush2.msra.mxu0 0.0
      %1257 = vmatprep.subr.mxu0 0.0
      %1258 = vmatpush2.msra.mxu0 0.0
      %1259 = vmatprep.subr.mxu0 0.0
      %1260 = vmatpush2.msra.mxu0 0.0
      %1261 = vmatprep.subr.mxu0 0.0
      %1262 = vmatpush2.msra.mxu0 0.0
      %1263 = vmatprep.subr.mxu0 0.0
      %1264 = vmatpush2.msra.mxu0 0.0
      %1265 = vmatprep.subr.mxu0 0.0
      %1266 = vmatpush2.msra.mxu0 0.0
      %1267 = vmatprep.subr.mxu0 0.0
      %1268 = vmatpush2.msra.mxu0 0.0
      %1269 = vmatprep.mubr.f32.mxu0 0.0
      %1270 = vmatmul.mubr.f32.gmra.mxu0 %v1194
      %v1271 = vpop.f32.mrf.mxu0
      %v1272 = vadd.f32 %v1191, %v1271
      %v1273 = vpop.f32.mrf.mxu0
      %v1274 = vadd.f32 %v1191, %v1273
      %1275 = vdwg.mxu0
      %1276 = vmatprep.subr.mxu0 0.0
      %1277 = vmatpush1.msra.mxu0 0.0
      %1278 = vmatprep.subr.mxu0 0.0
      %1279 = vmatpush1.msra.mxu0 0.0
      %1280 = vmatprep.subr.mxu0 0.0
      %1281 = vmatpush1.msra.mxu0 0.0
      %1282 = vmatprep.subr.mxu0 0.0
      %1283 = vmatpush1.msra.mxu0 0.0
      %1284 = vmatprep.subr.mxu0 0.0
      %1285 = vmatpush1.msra.mxu0 0.0
      %1286 = vmatprep.subr.mxu0 0.0
      %1287 = vmatpush1.msra.mxu0 0.0
      %1288 = vmatprep.subr.mxu0 0.0
      %1289 = vmatpush1.msra.mxu0 0.0
      %1290 = vmatprep.subr.mxu0 0.0
      %1291 = vmatpush1.msra.mxu0 0.0
      %1292 = vmatprep.subr.mxu0 0.0
      %1293 = vmatpush1.msra.mxu0 0.0
      %1294 = vmatprep.subr.mxu0 0.0
      %1295 = vmatpush1.msra.mxu0 0.0
      %1296 = vmatprep.subr.mxu0 0.0
      %1297 = vmatpush1.msra.mxu0 0.0
      %1298 = vmatprep.subr.mxu0 0.0
      %1299 = vmatpush1.msra.mxu0 %v1203
      %1300 = vmatprep.subr.mxu0 0.0
      %1301 = vmatpush1.msra.mxu0 %v1184
      %1302 = vmatprep.subr.mxu0 0.0
      %1303 = vmatpush1.msra.mxu0 %v1181
      %1304 = vmatprep.subr.mxu0 0.0
      %1305 = vmatpush1.msra.mxu0 %v1178
      %1306 = vmatprep.subr.mxu0 0.0
      %1307 = vmatpush1.msra.mxu0 %v1175
      %1308 = vmatprep.subr.mxu0 0.0
      %1309 = vmatpush2.msra.mxu0 0.0
      %1310 = vmatprep.subr.mxu0 0.0
      %1311 = vmatpush2.msra.mxu0 0.0
      %1312 = vmatprep.subr.mxu0 0.0
      %1313 = vmatpush2.msra.mxu0 0.0
      %1314 = vmatprep.subr.mxu0 0.0
      %1315 = vmatpush2.msra.mxu0 0.0
      %1316 = vmatprep.subr.mxu0 0.0
      %1317 = vmatpush2.msra.mxu0 0.0
      %1318 = vmatprep.subr.mxu0 0.0
      %1319 = vmatpush2.msra.mxu0 0.0
      %1320 = vmatprep.subr.mxu0 0.0
      %1321 = vmatpush2.msra.mxu0 0.0
      %1322 = vmatprep.subr.mxu0 0.0
      %1323 = vmatpush2.msra.mxu0 0.0
      %1324 = vmatprep.subr.mxu0 0.0
      %1325 = vmatpush2.msra.mxu0 0.0
      %1326 = vmatprep.subr.mxu0 0.0
      %1327 = vmatpush2.msra.mxu0 0.0
      %1328 = vmatprep.subr.mxu0 0.0
      %1329 = vmatpush2.msra.mxu0 0.0
      %1330 = vmatprep.subr.mxu0 0.0
      %1331 = vmatpush2.msra.mxu0 0.0
      %1332 = vmatprep.subr.mxu0 0.0
      %1333 = vmatpush2.msra.mxu0 0.0
      %1334 = vmatprep.subr.mxu0 0.0
      %1335 = vmatpush2.msra.mxu0 0.0
      %1336 = vmatprep.subr.mxu0 0.0
      %1337 = vmatpush2.msra.mxu0 0.0
      %1338 = vmatprep.subr.mxu0 0.0
      %1339 = vmatpush2.msra.mxu0 0.0
      %1340 = vmatprep.mubr.f32.mxu0 0.0
      %1341 = vmatmul.mubr.f32.gmra.mxu0 %v1194
      %v1342 = vpop.f32.mrf.mxu0
      %v1343 = vadd.f32 %v1191, %v1342
      %v1344 = vpop.f32.mrf.mxu0
      %1345 = vdwg.mxu0
      %vm1346 = vcmp.gt.f32.partialorder %v1272, 0.0
      %vm1347 = vcmp.gt.f32.partialorder %v1274, 0.0
      %vm1348 = vcmp.gt.f32.partialorder %v1343, 0.0
      %v1349 = vmul.f32 %v1272, 0.2
      %v1350 = vmul.f32 %v1274, 0.2
      %v1351 = vmul.f32 %v1343, 0.2
      %v1352 = vsel %vm1346, %v1272, %v1349
      %v1353 = vsel %vm1347, %v1274, %v1350
      %v1354 = vsel %vm1348, %v1343, %v1351
      %1357 = vrot.lane.b32.xlu0 %v1352, 56
      %v1358 = vpop.permute.xlu0 %1357
      %1359 = vrot.lane.b32.xlu0 %v1353, 56
      %v1360 = vpop.permute.xlu0 %1359
      %vm1361 = vcmask 457728
      %v1362 = vsel %vm1361, %v1358, %v1360
      %v1364 = vadd.f32 %v1352, %v1362
      %1365 = vrot.lane.b32.xlu0 %v1353, 112
      %v1366 = vpop.permute.xlu0 %1365
      %v1368 = vadd.f32 %v1364, %v1366
      %1370 = vrot.lane.b32.xlu0 %v1353, 40
      %v1371 = vpop.permute.xlu0 %1370
      %1372 = vrot.lane.b32.xlu0 %v1354, 40
      %v1373 = vpop.permute.xlu0 %1372
      %vm1374 = vcmask 326656
      %v1375 = vsel %vm1374, %v1371, %v1373
      %v1377 = vadd.f32 %v1368, %v1375
      %v1378 = vmul.f32 %v1377, 0.25
      %vm1379 = vcmask 588800
      %1380 = vst.msk [vmem:[%s249] sm:$0xff] %vm1379, %v1378
      %p1381 = scmp.lt.s32.totalorder %s17, 1
      %s1382 = scalar_select %p1381, %s17, 1
      %s1383 = smul.addr %s1382, 8
      %s1384 = scalar_lea.vmem %s6, %s1383
      // Predicated region
      $region45: #{discriminator_block.1} parent=43 // pred_check
        %p1385 = pneg %p166
      $region46: #{discriminator_block.1} parent=43 // pred_check_branch
        %1387 = sbr.rel (%p1385) target = $region48
      $region47: #{discriminator_block.1} parent=43 // pred_region
        _
      $region48: #{discriminator_block.1} parent=43 // pred_fallthru
        _
    $region44: #{discriminator_block.1} parent=5 // pred_fallthru
      _
    %p1388 = scmp.le.s32.totalorder 2, %s12
    // Predicated region
    $region49: #{discriminator_block.1} parent=5 // pred_check
      %p1389 = pneg %p1388
    $region50: #{discriminator_block.1} parent=5 // pred_check_branch
      %1391 = sbr.rel (%p1389) target = $region52
    $region51: #{discriminator_block.1} parent=5 // pred_region
      %s1392 = ssub.s32 %s12, 2
      // Predicated region
      $region53: #{discriminator_block.1} parent=51 // pred_check
        %p1393 = pneg %p172
      $region54: #{discriminator_block.1} parent=51 // pred_check_branch
        %1395 = sbr.rel (%p1393) target = $region56
      $region55: #{discriminator_block.1} parent=51 // pred_region
        %p1396 = scmp.lt.s32.totalorder %s18, 1
        %s1397 = scalar_select %p1396, %s18, 1
        %s1398 = smul.addr %s1397, 8
        %s1399 = scalar_lea.vmem %s6, %s1398
      $region56: #{discriminator_block.1} parent=51 // pred_fallthru
        _
    $region52: #{discriminator_block.1} parent=5 // pred_fallthru
      _
  $region6: #{discriminator_block.1} parent=0 // loop_footer
    %s16 = sadd.s32 1, %s12
  $region7: #{discriminator_block.1} parent=0 // loop_footer_branch
    %11 = sbr.rel target = $region3
  $region8: #{discriminator_block.1} parent=0 // loop_exit
    _

</llo_original>
